<compile_context>
chip_gen: v5e
topology: v5e:2x2
jax: 0.10.0
libtpu: 0.0.40
codegen_flags: <defaults>
</compile_context>

<pallas_src>
import functools

import jax
import jax.numpy as jnp
from jax import lax
from jax.experimental import pallas as pl
from jax.experimental.pallas import tpu as pltpu


def _dcor_partials_kernel(xu_ref, squ_col_ref, xut_ref, squ_row_ref,
                          xm_ref, sqm_col_ref, xmt_ref, sqm_row_ref,
                          o_ref, *, precision):
    """Per row-block: distances vs all rows for both tensors, emit 8 partial sums."""

    def dist_tile(x_blk_ref, sq_col_ref, xt_ref, sq_row_ref):
        # [TM, d] @ [d, B] on the MXU, native input dtype, f32 accumulation.
        gram = lax.dot_general(
            x_blk_ref[...], xt_ref[...],
            (((1,), (0,)), ((), ())),
            preferred_element_type=jnp.float32,
            precision=precision)                                   # [TM, B] f32
        d2 = sq_col_ref[...] + sq_row_ref[...] - 2.0 * gram        # (TM,1)+(1,B)
        d2c = jnp.maximum(d2, 0.0) + 1e-8   # == dist**2, matches sqrt(relu(.)+1e-8)
        return jnp.sqrt(d2c), d2c

    a, a2 = dist_tile(xu_ref, squ_col_ref, xut_ref, squ_row_ref)   # [TM, B] f32
    b, b2 = dist_tile(xm_ref, sqm_col_ref, xmt_ref, sqm_row_ref)

    def _tot(x):  # full reduce -> (1, 1)
        return jnp.sum(jnp.sum(x, axis=1, keepdims=True), axis=0, keepdims=True)

    rs_a = jnp.sum(a, axis=1, keepdims=True)   # [TM, 1] row sums (full rows)
    rs_b = jnp.sum(b, axis=1, keepdims=True)

    s_ab = _tot(a * b)                                   # sum a_ij * b_ij
    s_aa = _tot(a2)                                      # sum a_ij^2 (pre-sqrt)
    s_bb = _tot(b2)
    c_ab = jnp.sum(rs_a * rs_b, axis=0, keepdims=True)   # sum_i ra_i * rb_i
    c_aa = jnp.sum(rs_a * rs_a, axis=0, keepdims=True)
    c_bb = jnp.sum(rs_b * rs_b, axis=0, keepdims=True)
    t_a = jnp.sum(rs_a, axis=0, keepdims=True)           # sum a
    t_b = jnp.sum(rs_b, axis=0, keepdims=True)

    # Pack the 8 scalar partials into one lane-padded (8, 128) tile: partial k
    # lives on sublane k (all lanes identical); the wrapper reads lane 0.
    row_ids = lax.broadcasted_iota(jnp.int32, (8, 128), 0)
    tile = jnp.zeros((8, 128), jnp.float32)
    for idx, p in enumerate((s_ab, s_aa, s_bb, c_ab, c_aa, c_bb, t_a, t_b)):
        tile = tile + jnp.where(row_ids == idx, p, 0.0)
    o_ref[...] = tile.reshape(1, 8, 128)


def _device_vmem_capacity_bytes() -> int:
    try:
        cap = getattr(pltpu.get_tpu_info(), "vmem_capacity_bytes", None)
        if cap:
            return int(cap)
    except Exception:
        pass
    return 64 << 20  # conservative fallback: v7x per-TensorCore VMEM


def _choose_tiling(batch: int, dim: int, itemsize: int):
    """Pick the largest row-block TM that fits the device VMEM budget."""
    budget = int(_device_vmem_capacity_bytes() * 0.8)   # leave headroom

    def est(tm):
        resident = 2 * dim * batch * itemsize + 2 * batch * 4        # xT (x2) + sq rows
        streamed = 2 * (2 * tm * dim * itemsize + 2 * tm * 4)        # dbl-buffered blocks
        temps = 8 * tm * batch * 4                                   # f32 [TM,B] tiles
        out = 2 * 8 * 128 * 4
        return resident + streamed + temps + out + (1 << 20)

    candidates = [t for t in (512, 256, 128, 64, 32, 16, 8) if batch % t == 0]
    if not candidates:
        candidates = [batch]                                         # odd/small batch
    tm = candidates[-1]
    for cand in candidates:
        if est(cand) <= budget:
            tm = cand
            break
    vmem_limit = int(min(max(2 * est(tm), 32 << 20), max(budget, 32 << 20)))
    return tm, vmem_limit


def distance_correlation_loss(h_u, h_m, *, precision=None):
    """h_u, h_m: [B, d] arrays. Returns scalar loss 1 - dCor(h_u, h_m)."""
    assert h_u.shape == h_m.shape and h_u.ndim == 2
    batch, dim = h_u.shape
    itemsize = jnp.dtype(h_u.dtype).itemsize

    # f32 inputs: force exact-f32 gram so sq_i + sq_j - 2*gram cancellation
    # matches the torch f32 reference; bf16 inputs keep fast single-pass MXU.
    if precision is None and h_u.dtype == jnp.float32:
        precision = lax.Precision.HIGHEST

    tm, vmem_limit = _choose_tiling(batch, dim, itemsize)
    n_blk = batch // tm if batch % tm == 0 else 1
    if n_blk * tm != batch:
        tm, n_blk = batch, 1

    # One-time layout plumbing in the wrapper (recommended by the perf review):
    # transposed MXU RHS and the squared row norms in both layouts.
    xut = h_u.T                                   # [d, B], lane-dense on B
    xmt = h_m.T
    squ = jnp.sum(h_u.astype(jnp.float32) ** 2, axis=1)
    sqm = jnp.sum(h_m.astype(jnp.float32) ** 2, axis=1)
    squ_col, squ_row = squ.reshape(batch, 1), squ.reshape(1, batch)
    sqm_col, sqm_row = sqm.reshape(batch, 1), sqm.reshape(1, batch)

    cost = pl.CostEstimate(
        flops=4 * batch * batch * dim + 24 * batch * batch,
        transcendentals=2 * batch * batch,
        bytes_accessed=4 * batch * dim * itemsize + 4 * batch * 4
        + n_blk * 8 * 128 * 4,
    )
    kernel = functools.partial(_dcor_partials_kernel, precision=precision)

    def build(resident_mode):
        resident_kw = {} if resident_mode is None else {"pipeline_mode": resident_mode}
        in_specs = [
            pl.BlockSpec((tm, dim), lambda i: (i, 0)),                      # h_u block
            pl.BlockSpec((tm, 1), lambda i: (i, 0)),                        # sq_u col blk
            pl.BlockSpec((dim, batch), lambda i: (0, 0), **resident_kw),    # h_u^T
            pl.BlockSpec((1, batch), lambda i: (0, 0), **resident_kw),      # sq_u row
            pl.BlockSpec((tm, dim), lambda i: (i, 0)),                      # h_m block
            pl.BlockSpec((tm, 1), lambda i: (i, 0)),                        # sq_m col blk
            pl.BlockSpec((dim, batch), lambda i: (0, 0), **resident_kw),    # h_m^T
            pl.BlockSpec((1, batch), lambda i: (0, 0), **resident_kw),      # sq_m row
        ]
        return pl.pallas_call(
            kernel,
            out_shape=jax.ShapeDtypeStruct((n_blk, 8, 128), jnp.float32),
            grid_spec=pltpu.PrefetchScalarGridSpec(
                num_scalar_prefetch=0,
                grid=(n_blk,),
                in_specs=in_specs,
                out_specs=pl.BlockSpec((1, 8, 128), lambda i: (i, 0, 0)),
            ),
            compiler_params=pltpu.CompilerParams(
                # per-block partial outputs -> independent steps -> megacore-able
                dimension_semantics=("parallel",),
                vmem_limit_bytes=vmem_limit,
            ),
            cost_estimate=cost,
        )

    args = (h_u, squ_col, xut, squ_row, h_m, sqm_col, xmt, sqm_row)
    try:
        partials = build(pl.Buffered(1))(*args)      # single-buffer resident inputs
    except Exception:
        partials = build(None)(*args)                # fallback: default buffering

    # 8-scalar closed-form dCov finalize (negligible; kept in the wrapper so the
    # grid axis stays "parallel").  Identity for symmetric distance matrices:
    #   mean(A∘B) = Σab/n² − 2·Σ(ra·rb)/n³ + (Σa)(Σb)/n⁴
    p = partials[:, :, 0].astype(jnp.float32).sum(axis=0)
    s_ab, s_aa, s_bb, c_ab, c_aa, c_bb, t_a, t_b = p
    n = float(batch)
    inv_n2 = 1.0 / (n * n)
    inv_n3 = inv_n2 / n
    inv_n4 = inv_n2 * inv_n2
    dcov_xy = s_ab * inv_n2 - 2.0 * c_ab * inv_n3 + t_a * t_b * inv_n4
    dcov_xx = s_aa * inv_n2 - 2.0 * c_aa * inv_n3 + t_a * t_a * inv_n4
    dcov_yy = s_bb * inv_n2 - 2.0 * c_bb * inv_n3 + t_b * t_b * inv_n4
    dcor = dcov_xy / jnp.sqrt(dcov_xx * dcov_yy + 1e-8)
    return (1.0 - dcor).astype(jnp.float32)


# ----------------------------------------------------------------------------
# Pure-JAX references for the self-check.
# ----------------------------------------------------------------------------
def _pdist_ref(x):
    sq = jnp.sum(x * x, axis=1, keepdims=True)
    d2 = sq + sq.T - 2.0 * (x @ x.T)
    return jnp.sqrt(jnp.maximum(d2, 0.0) + 1e-8)


def _reference_explicit(h_u, h_m):
    """Mirrors the PyTorch forward literally (explicit double centering)."""
    a = _pdist_ref(h_u)
    b = _pdist_ref(h_m)
    A = a - a.mean(axis=0) - a.mean(axis=1, keepdims=True) + a.mean()
    B = b - b.mean(axis=0) - b.mean(axis=1, keepdims=True) + b.mean()
    dcov_xy = (A * B).mean()
    dcov_xx = (A * A).mean()
    dcov_yy = (B * B).mean()
    return 1.0 - dcov_xy / jnp.sqrt(dcov_xx * dcov_yy + 1e-8)


def _reference_identity(h_u, h_m):
    """Same closed-form algebra as the kernel (mathematically identical)."""
    a = _pdist_ref(h_u)
    b = _pdist_ref(h_m)
    n = a.shape[0]
    rs_a = a.sum(axis=1)
    rs_b = b.sum(axis=1)
    n2, n3, n4 = n * n, n ** 3, n ** 4
    dxy = (a * b).sum() / n2 - 2.0 * (rs_a * rs_b).sum() / n3 + rs_a.sum() * rs_b.sum() / n4
    dxx = (a * a).sum() / n2 - 2.0 * (rs_a * rs_a).sum() / n3 + rs_a.sum() * rs_a.sum() / n4
    dyy = (b * b).sum() / n2 - 2.0 * (rs_b * rs_b).sum() / n3 + rs_b.sum() * rs_b.sum() / n4
    return 1.0 - dxy / jnp.sqrt(dxx * dyy + 1e-8)


if __name__ == "__main__":
    key = jax.random.PRNGKey(0)
    k_u, k_m = jax.random.split(key)
    B, d = 8, 32
    h_u = jax.random.normal(k_u, (B, d), dtype=jnp.float32)
    h_m = jax.random.normal(k_m, (B, d), dtype=jnp.float32)

    loss = distance_correlation_loss(h_u, h_m)
    jax.block_until_ready(loss)

    ref_ident = _reference_identity(h_u, h_m)   # same algebra -> tight tolerance
    ref_torch = _reference_explicit(h_u, h_m)   # faithful torch formulation
    assert jnp.isfinite(loss), loss
    assert jnp.allclose(loss, ref_ident, atol=1e-4, rtol=1e-4), (loss, ref_ident)
    assert jnp.allclose(loss, ref_torch, atol=1e-3, rtol=1e-3), (loss, ref_torch)
    print("KERNEL_OK")
</pallas_src>

<mosaic_0001>
module attributes {stable_mosaic.version = 11 : i64} {
  func.func @_dcor_partials_kernel(%arg0: i32, %arg1: memref<8x32xf32, #tpu.memory_space<vmem>>, %arg2: memref<8x1xf32, #tpu.memory_space<vmem>>, %arg3: memref<32x8xf32, #tpu.memory_space<vmem>>, %arg4: memref<1x8xf32, #tpu.memory_space<vmem>>, %arg5: memref<8x32xf32, #tpu.memory_space<vmem>>, %arg6: memref<8x1xf32, #tpu.memory_space<vmem>>, %arg7: memref<32x8xf32, #tpu.memory_space<vmem>>, %arg8: memref<1x8xf32, #tpu.memory_space<vmem>>, %arg9: memref<1x8x128xf32, #tpu.memory_space<vmem>>) attributes {dimension_semantics = [#tpu.dimension_semantics<parallel>], iteration_bounds = array<i64: 1>, scalar_prefetch = 0 : i64, scratch_operands = 0 : i64, tpu.core_type = #tpu.core_type<tc>, window_params = [{transform_indices = @transform_0, window_bounds = array<i64: 8, 32>}, {transform_indices = @transform_1, window_bounds = array<i64: 8, 1>}, {pipeline_mode = #tpu.pipeline_mode<synchronous>, transform_indices = @transform_2, window_bounds = array<i64: 32, 8>}, {pipeline_mode = #tpu.pipeline_mode<synchronous>, transform_indices = @transform_3, window_bounds = array<i64: 1, 8>}, {transform_indices = @transform_4, window_bounds = array<i64: 8, 32>}, {transform_indices = @transform_5, window_bounds = array<i64: 8, 1>}, {pipeline_mode = #tpu.pipeline_mode<synchronous>, transform_indices = @transform_6, window_bounds = array<i64: 32, 8>}, {pipeline_mode = #tpu.pipeline_mode<synchronous>, transform_indices = @transform_7, window_bounds = array<i64: 1, 8>}, {transform_indices = @transform_8, window_bounds = array<i64: 1, 8, 128>}]} {
    %c0 = arith.constant 0 : index
    %c0_0 = arith.constant 0 : index
    %0 = vector.load %arg1[%c0, %c0_0] : memref<8x32xf32, #tpu.memory_space<vmem>>, vector<8x32xf32>
    %c0_1 = arith.constant 0 : index
    %c0_2 = arith.constant 0 : index
    %1 = vector.load %arg3[%c0_1, %c0_2] : memref<32x8xf32, #tpu.memory_space<vmem>>, vector<32x8xf32>
    %cst = arith.constant dense<0.000000e+00> : vector<8x8xf32>
    %2 = tpu.matmul %0, %1, %cst {dimension_numbers = #tpu.dot_dimension_numbers<[1], [0], [0], [1], [0, 0, 1, 1], [], []>, precision = #tpu.contract_precision<fp32>} : vector<8x32xf32>, vector<32x8xf32>, vector<8x8xf32> -> vector<8x8xf32>
    %c0_3 = arith.constant 0 : index
    %c0_4 = arith.constant 0 : index
    %3 = vector.load %arg2[%c0_3, %c0_4] : memref<8x1xf32, #tpu.memory_space<vmem>>, vector<8x1xf32>
    %c0_5 = arith.constant 0 : index
    %c0_6 = arith.constant 0 : index
    %4 = vector.load %arg4[%c0_5, %c0_6] : memref<1x8xf32, #tpu.memory_space<vmem>>, vector<1x8xf32>
    %5 = vector.broadcast %3 : vector<8x1xf32> to vector<8x8xf32>
    %6 = vector.broadcast %4 : vector<1x8xf32> to vector<8x8xf32>
    %7 = arith.addf %5, %6 : vector<8x8xf32>
    %cst_7 = arith.constant 2.000000e+00 : f32
    %8 = vector.broadcast %cst_7 : f32 to vector<8x8xf32>
    %9 = arith.mulf %8, %2 : vector<8x8xf32>
    %10 = arith.subf %7, %9 : vector<8x8xf32>
    %cst_8 = arith.constant 0.000000e+00 : f32
    %11 = vector.broadcast %cst_8 : f32 to vector<8x8xf32>
    %12 = arith.maximumf %10, %11 : vector<8x8xf32>
    %cst_9 = arith.constant 9.99999993E-9 : f32
    %13 = vector.broadcast %cst_9 : f32 to vector<8x8xf32>
    %14 = arith.addf %12, %13 : vector<8x8xf32>
    %15 = math.sqrt %14 : vector<8x8xf32>
    %c0_10 = arith.constant 0 : index
    %c0_11 = arith.constant 0 : index
    %16 = vector.load %arg5[%c0_10, %c0_11] : memref<8x32xf32, #tpu.memory_space<vmem>>, vector<8x32xf32>
    %c0_12 = arith.constant 0 : index
    %c0_13 = arith.constant 0 : index
    %17 = vector.load %arg7[%c0_12, %c0_13] : memref<32x8xf32, #tpu.memory_space<vmem>>, vector<32x8xf32>
    %cst_14 = arith.constant dense<0.000000e+00> : vector<8x8xf32>
    %18 = tpu.matmul %16, %17, %cst_14 {dimension_numbers = #tpu.dot_dimension_numbers<[1], [0], [0], [1], [0, 0, 1, 1], [], []>, precision = #tpu.contract_precision<fp32>} : vector<8x32xf32>, vector<32x8xf32>, vector<8x8xf32> -> vector<8x8xf32>
    %c0_15 = arith.constant 0 : index
    %c0_16 = arith.constant 0 : index
    %19 = vector.load %arg6[%c0_15, %c0_16] : memref<8x1xf32, #tpu.memory_space<vmem>>, vector<8x1xf32>
    %c0_17 = arith.constant 0 : index
    %c0_18 = arith.constant 0 : index
    %20 = vector.load %arg8[%c0_17, %c0_18] : memref<1x8xf32, #tpu.memory_space<vmem>>, vector<1x8xf32>
    %21 = vector.broadcast %19 : vector<8x1xf32> to vector<8x8xf32>
    %22 = vector.broadcast %20 : vector<1x8xf32> to vector<8x8xf32>
    %23 = arith.addf %21, %22 : vector<8x8xf32>
    %cst_19 = arith.constant 2.000000e+00 : f32
    %24 = vector.broadcast %cst_19 : f32 to vector<8x8xf32>
    %25 = arith.mulf %24, %18 : vector<8x8xf32>
    %26 = arith.subf %23, %25 : vector<8x8xf32>
    %cst_20 = arith.constant 0.000000e+00 : f32
    %27 = vector.broadcast %cst_20 : f32 to vector<8x8xf32>
    %28 = arith.maximumf %26, %27 : vector<8x8xf32>
    %cst_21 = arith.constant 9.99999993E-9 : f32
    %29 = vector.broadcast %cst_21 : f32 to vector<8x8xf32>
    %30 = arith.addf %28, %29 : vector<8x8xf32>
    %31 = math.sqrt %30 : vector<8x8xf32>
    %cst_22 = arith.constant dense<0.000000e+00> : vector<8xf32>
    %32 = vector.multi_reduction <add>, %15, %cst_22 [1] : vector<8x8xf32> to vector<8xf32>
    %33 = vector.shape_cast %32 : vector<8xf32> to vector<8x1xf32>
    %cst_23 = arith.constant dense<0.000000e+00> : vector<8xf32>
    %34 = vector.multi_reduction <add>, %31, %cst_23 [1] : vector<8x8xf32> to vector<8xf32>
    %35 = vector.shape_cast %34 : vector<8xf32> to vector<8x1xf32>
    %36 = arith.mulf %15, %31 : vector<8x8xf32>
    %cst_24 = arith.constant dense<0.000000e+00> : vector<8xf32>
    %37 = vector.multi_reduction <add>, %36, %cst_24 [1] : vector<8x8xf32> to vector<8xf32>
    %38 = vector.shape_cast %37 : vector<8xf32> to vector<8x1xf32>
    %cst_25 = arith.constant dense<0.000000e+00> : vector<1xf32>
    %39 = vector.multi_reduction <add>, %38, %cst_25 [0] : vector<8x1xf32> to vector<1xf32>
    %40 = vector.shape_cast %39 : vector<1xf32> to vector<1x1xf32>
    %cst_26 = arith.constant dense<0.000000e+00> : vector<8xf32>
    %41 = vector.multi_reduction <add>, %14, %cst_26 [1] : vector<8x8xf32> to vector<8xf32>
    %42 = vector.shape_cast %41 : vector<8xf32> to vector<8x1xf32>
    %cst_27 = arith.constant dense<0.000000e+00> : vector<1xf32>
    %43 = vector.multi_reduction <add>, %42, %cst_27 [0] : vector<8x1xf32> to vector<1xf32>
    %44 = vector.shape_cast %43 : vector<1xf32> to vector<1x1xf32>
    %cst_28 = arith.constant dense<0.000000e+00> : vector<8xf32>
    %45 = vector.multi_reduction <add>, %30, %cst_28 [1] : vector<8x8xf32> to vector<8xf32>
    %46 = vector.shape_cast %45 : vector<8xf32> to vector<8x1xf32>
    %cst_29 = arith.constant dense<0.000000e+00> : vector<1xf32>
    %47 = vector.multi_reduction <add>, %46, %cst_29 [0] : vector<8x1xf32> to vector<1xf32>
    %48 = vector.shape_cast %47 : vector<1xf32> to vector<1x1xf32>
    %49 = arith.mulf %33, %35 : vector<8x1xf32>
    %cst_30 = arith.constant dense<0.000000e+00> : vector<1xf32>
    %50 = vector.multi_reduction <add>, %49, %cst_30 [0] : vector<8x1xf32> to vector<1xf32>
    %51 = vector.shape_cast %50 : vector<1xf32> to vector<1x1xf32>
    %52 = arith.mulf %33, %33 : vector<8x1xf32>
    %cst_31 = arith.constant dense<0.000000e+00> : vector<1xf32>
    %53 = vector.multi_reduction <add>, %52, %cst_31 [0] : vector<8x1xf32> to vector<1xf32>
    %54 = vector.shape_cast %53 : vector<1xf32> to vector<1x1xf32>
    %55 = arith.mulf %35, %35 : vector<8x1xf32>
    %cst_32 = arith.constant dense<0.000000e+00> : vector<1xf32>
    %56 = vector.multi_reduction <add>, %55, %cst_32 [0] : vector<8x1xf32> to vector<1xf32>
    %57 = vector.shape_cast %56 : vector<1xf32> to vector<1x1xf32>
    %cst_33 = arith.constant dense<0.000000e+00> : vector<1xf32>
    %58 = vector.multi_reduction <add>, %33, %cst_33 [0] : vector<8x1xf32> to vector<1xf32>
    %59 = vector.shape_cast %58 : vector<1xf32> to vector<1x1xf32>
    %cst_34 = arith.constant dense<0.000000e+00> : vector<1xf32>
    %60 = vector.multi_reduction <add>, %35, %cst_34 [0] : vector<8x1xf32> to vector<1xf32>
    %61 = vector.shape_cast %60 : vector<1xf32> to vector<1x1xf32>
    %62 = tpu.iota {dimensions = array<i32: 0>} : vector<8x128xi32>
    %cst_35 = arith.constant 0.000000e+00 : f32
    %63 = vector.broadcast %cst_35 : f32 to vector<8x128xf32>
    %c0_i32 = arith.constant 0 : i32
    %64 = vector.broadcast %c0_i32 : i32 to vector<8x128xi32>
    %65 = arith.cmpi eq, %62, %64 : vector<8x128xi32>
    %cst_36 = arith.constant 0.000000e+00 : f32
    %66 = vector.shape_cast %40 : vector<1x1xf32> to vector<1x1xf32>
    %67 = vector.broadcast %66 : vector<1x1xf32> to vector<8x128xf32>
    %68 = vector.broadcast %cst_36 : f32 to vector<8x128xf32>
    %69 = arith.select %65, %67, %68 : vector<8x128xi1>, vector<8x128xf32>
    %70 = arith.addf %63, %69 : vector<8x128xf32>
    %c1_i32 = arith.constant 1 : i32
    %71 = vector.broadcast %c1_i32 : i32 to vector<8x128xi32>
    %72 = arith.cmpi eq, %62, %71 : vector<8x128xi32>
    %cst_37 = arith.constant 0.000000e+00 : f32
    %73 = vector.shape_cast %44 : vector<1x1xf32> to vector<1x1xf32>
    %74 = vector.broadcast %73 : vector<1x1xf32> to vector<8x128xf32>
    %75 = vector.broadcast %cst_37 : f32 to vector<8x128xf32>
    %76 = arith.select %72, %74, %75 : vector<8x128xi1>, vector<8x128xf32>
    %77 = arith.addf %70, %76 : vector<8x128xf32>
    %c2_i32 = arith.constant 2 : i32
    %78 = vector.broadcast %c2_i32 : i32 to vector<8x128xi32>
    %79 = arith.cmpi eq, %62, %78 : vector<8x128xi32>
    %cst_38 = arith.constant 0.000000e+00 : f32
    %80 = vector.shape_cast %48 : vector<1x1xf32> to vector<1x1xf32>
    %81 = vector.broadcast %80 : vector<1x1xf32> to vector<8x128xf32>
    %82 = vector.broadcast %cst_38 : f32 to vector<8x128xf32>
    %83 = arith.select %79, %81, %82 : vector<8x128xi1>, vector<8x128xf32>
    %84 = arith.addf %77, %83 : vector<8x128xf32>
    %c3_i32 = arith.constant 3 : i32
    %85 = vector.broadcast %c3_i32 : i32 to vector<8x128xi32>
    %86 = arith.cmpi eq, %62, %85 : vector<8x128xi32>
    %cst_39 = arith.constant 0.000000e+00 : f32
    %87 = vector.shape_cast %51 : vector<1x1xf32> to vector<1x1xf32>
    %88 = vector.broadcast %87 : vector<1x1xf32> to vector<8x128xf32>
    %89 = vector.broadcast %cst_39 : f32 to vector<8x128xf32>
    %90 = arith.select %86, %88, %89 : vector<8x128xi1>, vector<8x128xf32>
    %91 = arith.addf %84, %90 : vector<8x128xf32>
    %c4_i32 = arith.constant 4 : i32
    %92 = vector.broadcast %c4_i32 : i32 to vector<8x128xi32>
    %93 = arith.cmpi eq, %62, %92 : vector<8x128xi32>
    %cst_40 = arith.constant 0.000000e+00 : f32
    %94 = vector.shape_cast %54 : vector<1x1xf32> to vector<1x1xf32>
    %95 = vector.broadcast %94 : vector<1x1xf32> to vector<8x128xf32>
    %96 = vector.broadcast %cst_40 : f32 to vector<8x128xf32>
    %97 = arith.select %93, %95, %96 : vector<8x128xi1>, vector<8x128xf32>
    %98 = arith.addf %91, %97 : vector<8x128xf32>
    %c5_i32 = arith.constant 5 : i32
    %99 = vector.broadcast %c5_i32 : i32 to vector<8x128xi32>
    %100 = arith.cmpi eq, %62, %99 : vector<8x128xi32>
    %cst_41 = arith.constant 0.000000e+00 : f32
    %101 = vector.shape_cast %57 : vector<1x1xf32> to vector<1x1xf32>
    %102 = vector.broadcast %101 : vector<1x1xf32> to vector<8x128xf32>
    %103 = vector.broadcast %cst_41 : f32 to vector<8x128xf32>
    %104 = arith.select %100, %102, %103 : vector<8x128xi1>, vector<8x128xf32>
    %105 = arith.addf %98, %104 : vector<8x128xf32>
    %c6_i32 = arith.constant 6 : i32
    %106 = vector.broadcast %c6_i32 : i32 to vector<8x128xi32>
    %107 = arith.cmpi eq, %62, %106 : vector<8x128xi32>
    %cst_42 = arith.constant 0.000000e+00 : f32
    %108 = vector.shape_cast %59 : vector<1x1xf32> to vector<1x1xf32>
    %109 = vector.broadcast %108 : vector<1x1xf32> to vector<8x128xf32>
    %110 = vector.broadcast %cst_42 : f32 to vector<8x128xf32>
    %111 = arith.select %107, %109, %110 : vector<8x128xi1>, vector<8x128xf32>
    %112 = arith.addf %105, %111 : vector<8x128xf32>
    %c7_i32 = arith.constant 7 : i32
    %113 = vector.broadcast %c7_i32 : i32 to vector<8x128xi32>
    %114 = arith.cmpi eq, %62, %113 : vector<8x128xi32>
    %cst_43 = arith.constant 0.000000e+00 : f32
    %115 = vector.shape_cast %61 : vector<1x1xf32> to vector<1x1xf32>
    %116 = vector.broadcast %115 : vector<1x1xf32> to vector<8x128xf32>
    %117 = vector.broadcast %cst_43 : f32 to vector<8x128xf32>
    %118 = arith.select %114, %116, %117 : vector<8x128xi1>, vector<8x128xf32>
    %119 = arith.addf %112, %118 : vector<8x128xf32>
    %120 = vector.shape_cast %119 : vector<8x128xf32> to vector<1x8x128xf32>
    %c0_44 = arith.constant 0 : index
    %c0_45 = arith.constant 0 : index
    %c0_46 = arith.constant 0 : index
    %121 = vector.load %arg9[%c0_44, %c0_45, %c0_46] : memref<1x8x128xf32, #tpu.memory_space<vmem>>, vector<1x8x128xf32>
    tpu.vector_store %arg9[%c0_44, %c0_45, %c0_46], %120 {strides = array<i32>} : memref<1x8x128xf32, #tpu.memory_space<vmem>>, vector<1x8x128xf32>,
    return
  }
  func.func @transform_0(%arg0: i32) -> (i32, i32) {
    %c0_i32 = arith.constant 0 : i32
    %c0_i32_0 = arith.constant 0 : i32
    return %arg0, %c0_i32 : i32, i32
  }
  func.func @transform_1(%arg0: i32) -> (i32, i32) {
    %c0_i32 = arith.constant 0 : i32
    %c0_i32_0 = arith.constant 0 : i32
    return %arg0, %c0_i32 : i32, i32
  }
  func.func @transform_2(%arg0: i32) -> (i32, i32) {
    %c0_i32 = arith.constant 0 : i32
    %c0_i32_0 = arith.constant 0 : i32
    %c0_i32_1 = arith.constant 0 : i32
    return %c0_i32, %c0_i32_0 : i32, i32
  }
  func.func @transform_3(%arg0: i32) -> (i32, i32) {
    %c0_i32 = arith.constant 0 : i32
    %c0_i32_0 = arith.constant 0 : i32
    %c0_i32_1 = arith.constant 0 : i32
    return %c0_i32, %c0_i32_0 : i32, i32
  }
  func.func @transform_4(%arg0: i32) -> (i32, i32) {
    %c0_i32 = arith.constant 0 : i32
    %c0_i32_0 = arith.constant 0 : i32
    return %arg0, %c0_i32 : i32, i32
  }
  func.func @transform_5(%arg0: i32) -> (i32, i32) {
    %c0_i32 = arith.constant 0 : i32
    %c0_i32_0 = arith.constant 0 : i32
    return %arg0, %c0_i32 : i32, i32
  }
  func.func @transform_6(%arg0: i32) -> (i32, i32) {
    %c0_i32 = arith.constant 0 : i32
    %c0_i32_0 = arith.constant 0 : i32
    %c0_i32_1 = arith.constant 0 : i32
    return %c0_i32, %c0_i32_0 : i32, i32
  }
  func.func @transform_7(%arg0: i32) -> (i32, i32) {
    %c0_i32 = arith.constant 0 : i32
    %c0_i32_0 = arith.constant 0 : i32
    %c0_i32_1 = arith.constant 0 : i32
    return %c0_i32, %c0_i32_0 : i32, i32
  }
  func.func @transform_8(%arg0: i32) -> (i32, i32, i32) {
    %c0_i32 = arith.constant 0 : i32
    %c0_i32_0 = arith.constant 0 : i32
    %c0_i32_1 = arith.constant 0 : i32
    return %arg0, %c0_i32, %c0_i32_0 : i32, i32, i32
  }
}

module attributes {stable_mosaic.version = 11 : i64} {
  func.func @_dcor_partials_kernel(%arg0: i32, %arg1: memref<8x32xf32, #tpu.memory_space<vmem>>, %arg2: memref<8x1xf32, #tpu.memory_space<vmem>>, %arg3: memref<32x8xf32, #tpu.memory_space<vmem>>, %arg4: memref<1x8xf32, #tpu.memory_space<vmem>>, %arg5: memref<8x32xf32, #tpu.memory_space<vmem>>, %arg6: memref<8x1xf32, #tpu.memory_space<vmem>>, %arg7: memref<32x8xf32, #tpu.memory_space<vmem>>, %arg8: memref<1x8xf32, #tpu.memory_space<vmem>>, %arg9: memref<1x8x128xf32, #tpu.memory_space<vmem>>) attributes {dimension_semantics = [#tpu.dimension_semantics<parallel>], iteration_bounds = array<i64: 1>, scalar_prefetch = 0 : i64, scratch_operands = 0 : i64, tpu.core_type = #tpu.core_type<tc>, window_params = [{transform_indices = @transform_0, window_bounds = array<i64: 8, 32>}, {transform_indices = @transform_1, window_bounds = array<i64: 8, 1>}, {pipeline_mode = #tpu.pipeline_mode<synchronous>, transform_indices = @transform_2, window_bounds = array<i64: 32, 8>}, {pipeline_mode = #tpu.pipeline_mode<synchronous>, transform_indices = @transform_3, window_bounds = array<i64: 1, 8>}, {transform_indices = @transform_4, window_bounds = array<i64: 8, 32>}, {transform_indices = @transform_5, window_bounds = array<i64: 8, 1>}, {pipeline_mode = #tpu.pipeline_mode<synchronous>, transform_indices = @transform_6, window_bounds = array<i64: 32, 8>}, {pipeline_mode = #tpu.pipeline_mode<synchronous>, transform_indices = @transform_7, window_bounds = array<i64: 1, 8>}, {transform_indices = @transform_8, window_bounds = array<i64: 1, 8, 128>}]} {
    %c0 = arith.constant 0 : index
    %c0_0 = arith.constant 0 : index
    %0 = vector.load %arg1[%c0, %c0_0] : memref<8x32xf32, #tpu.memory_space<vmem>>, vector<8x32xf32>
    %c0_1 = arith.constant 0 : index
    %c0_2 = arith.constant 0 : index
    %1 = vector.load %arg3[%c0_1, %c0_2] : memref<32x8xf32, #tpu.memory_space<vmem>>, vector<32x8xf32>
    %cst = arith.constant dense<0.000000e+00> : vector<8x8xf32>
    %2 = tpu.matmul %0, %1, %cst {dimension_numbers = #tpu.dot_dimension_numbers<[1], [0], [0], [1], [0, 0, 1, 1], [], []>, precision = #tpu.contract_precision<fp32>} : vector<8x32xf32>, vector<32x8xf32>, vector<8x8xf32> -> vector<8x8xf32>
    %c0_3 = arith.constant 0 : index
    %c0_4 = arith.constant 0 : index
    %3 = vector.load %arg2[%c0_3, %c0_4] : memref<8x1xf32, #tpu.memory_space<vmem>>, vector<8x1xf32>
    %c0_5 = arith.constant 0 : index
    %c0_6 = arith.constant 0 : index
    %4 = vector.load %arg4[%c0_5, %c0_6] : memref<1x8xf32, #tpu.memory_space<vmem>>, vector<1x8xf32>
    %5 = vector.broadcast %3 : vector<8x1xf32> to vector<8x8xf32>
    %6 = vector.broadcast %4 : vector<1x8xf32> to vector<8x8xf32>
    %7 = arith.addf %5, %6 : vector<8x8xf32>
    %cst_7 = arith.constant 2.000000e+00 : f32
    %8 = vector.broadcast %cst_7 : f32 to vector<8x8xf32>
    %9 = arith.mulf %8, %2 : vector<8x8xf32>
    %10 = arith.subf %7, %9 : vector<8x8xf32>
    %cst_8 = arith.constant 0.000000e+00 : f32
    %11 = vector.broadcast %cst_8 : f32 to vector<8x8xf32>
    %12 = arith.maximumf %10, %11 : vector<8x8xf32>
    %cst_9 = arith.constant 9.99999993E-9 : f32
    %13 = vector.broadcast %cst_9 : f32 to vector<8x8xf32>
    %14 = arith.addf %12, %13 : vector<8x8xf32>
    %15 = math.sqrt %14 : vector<8x8xf32>
    %c0_10 = arith.constant 0 : index
    %c0_11 = arith.constant 0 : index
    %16 = vector.load %arg5[%c0_10, %c0_11] : memref<8x32xf32, #tpu.memory_space<vmem>>, vector<8x32xf32>
    %c0_12 = arith.constant 0 : index
    %c0_13 = arith.constant 0 : index
    %17 = vector.load %arg7[%c0_12, %c0_13] : memref<32x8xf32, #tpu.memory_space<vmem>>, vector<32x8xf32>
    %cst_14 = arith.constant dense<0.000000e+00> : vector<8x8xf32>
    %18 = tpu.matmul %16, %17, %cst_14 {dimension_numbers = #tpu.dot_dimension_numbers<[1], [0], [0], [1], [0, 0, 1, 1], [], []>, precision = #tpu.contract_precision<fp32>} : vector<8x32xf32>, vector<32x8xf32>, vector<8x8xf32> -> vector<8x8xf32>
    %c0_15 = arith.constant 0 : index
    %c0_16 = arith.constant 0 : index
    %19 = vector.load %arg6[%c0_15, %c0_16] : memref<8x1xf32, #tpu.memory_space<vmem>>, vector<8x1xf32>
    %c0_17 = arith.constant 0 : index
    %c0_18 = arith.constant 0 : index
    %20 = vector.load %arg8[%c0_17, %c0_18] : memref<1x8xf32, #tpu.memory_space<vmem>>, vector<1x8xf32>
    %21 = vector.broadcast %19 : vector<8x1xf32> to vector<8x8xf32>
    %22 = vector.broadcast %20 : vector<1x8xf32> to vector<8x8xf32>
    %23 = arith.addf %21, %22 : vector<8x8xf32>
    %cst_19 = arith.constant 2.000000e+00 : f32
    %24 = vector.broadcast %cst_19 : f32 to vector<8x8xf32>
    %25 = arith.mulf %24, %18 : vector<8x8xf32>
    %26 = arith.subf %23, %25 : vector<8x8xf32>
    %cst_20 = arith.constant 0.000000e+00 : f32
    %27 = vector.broadcast %cst_20 : f32 to vector<8x8xf32>
    %28 = arith.maximumf %26, %27 : vector<8x8xf32>
    %cst_21 = arith.constant 9.99999993E-9 : f32
    %29 = vector.broadcast %cst_21 : f32 to vector<8x8xf32>
    %30 = arith.addf %28, %29 : vector<8x8xf32>
    %31 = math.sqrt %30 : vector<8x8xf32>
    %cst_22 = arith.constant dense<0.000000e+00> : vector<8xf32>
    %32 = vector.multi_reduction <add>, %15, %cst_22 [1] : vector<8x8xf32> to vector<8xf32>
    %33 = vector.shape_cast %32 : vector<8xf32> to vector<8x1xf32>
    %cst_23 = arith.constant dense<0.000000e+00> : vector<8xf32>
    %34 = vector.multi_reduction <add>, %31, %cst_23 [1] : vector<8x8xf32> to vector<8xf32>
    %35 = vector.shape_cast %34 : vector<8xf32> to vector<8x1xf32>
    %36 = arith.mulf %15, %31 : vector<8x8xf32>
    %cst_24 = arith.constant dense<0.000000e+00> : vector<8xf32>
    %37 = vector.multi_reduction <add>, %36, %cst_24 [1] : vector<8x8xf32> to vector<8xf32>
    %38 = vector.shape_cast %37 : vector<8xf32> to vector<8x1xf32>
    %cst_25 = arith.constant dense<0.000000e+00> : vector<1xf32>
    %39 = vector.multi_reduction <add>, %38, %cst_25 [0] : vector<8x1xf32> to vector<1xf32>
    %40 = vector.shape_cast %39 : vector<1xf32> to vector<1x1xf32>
    %cst_26 = arith.constant dense<0.000000e+00> : vector<8xf32>
    %41 = vector.multi_reduction <add>, %14, %cst_26 [1] : vector<8x8xf32> to vector<8xf32>
    %42 = vector.shape_cast %41 : vector<8xf32> to vector<8x1xf32>
    %cst_27 = arith.constant dense<0.000000e+00> : vector<1xf32>
    %43 = vector.multi_reduction <add>, %42, %cst_27 [0] : vector<8x1xf32> to vector<1xf32>
    %44 = vector.shape_cast %43 : vector<1xf32> to vector<1x1xf32>
    %cst_28 = arith.constant dense<0.000000e+00> : vector<8xf32>
    %45 = vector.multi_reduction <add>, %30, %cst_28 [1] : vector<8x8xf32> to vector<8xf32>
    %46 = vector.shape_cast %45 : vector<8xf32> to vector<8x1xf32>
    %cst_29 = arith.constant dense<0.000000e+00> : vector<1xf32>
    %47 = vector.multi_reduction <add>, %46, %cst_29 [0] : vector<8x1xf32> to vector<1xf32>
    %48 = vector.shape_cast %47 : vector<1xf32> to vector<1x1xf32>
    %49 = arith.mulf %33, %35 : vector<8x1xf32>
    %cst_30 = arith.constant dense<0.000000e+00> : vector<1xf32>
    %50 = vector.multi_reduction <add>, %49, %cst_30 [0] : vector<8x1xf32> to vector<1xf32>
    %51 = vector.shape_cast %50 : vector<1xf32> to vector<1x1xf32>
    %52 = arith.mulf %33, %33 : vector<8x1xf32>
    %cst_31 = arith.constant dense<0.000000e+00> : vector<1xf32>
    %53 = vector.multi_reduction <add>, %52, %cst_31 [0] : vector<8x1xf32> to vector<1xf32>
    %54 = vector.shape_cast %53 : vector<1xf32> to vector<1x1xf32>
    %55 = arith.mulf %35, %35 : vector<8x1xf32>
    %cst_32 = arith.constant dense<0.000000e+00> : vector<1xf32>
    %56 = vector.multi_reduction <add>, %55, %cst_32 [0] : vector<8x1xf32> to vector<1xf32>
    %57 = vector.shape_cast %56 : vector<1xf32> to vector<1x1xf32>
    %cst_33 = arith.constant dense<0.000000e+00> : vector<1xf32>
    %58 = vector.multi_reduction <add>, %33, %cst_33 [0] : vector<8x1xf32> to vector<1xf32>
    %59 = vector.shape_cast %58 : vector<1xf32> to vector<1x1xf32>
    %cst_34 = arith.constant dense<0.000000e+00> : vector<1xf32>
    %60 = vector.multi_reduction <add>, %35, %cst_34 [0] : vector<8x1xf32> to vector<1xf32>
    %61 = vector.shape_cast %60 : vector<1xf32> to vector<1x1xf32>
    %62 = tpu.iota {dimensions = array<i32: 0>} : vector<8x128xi32>
    %cst_35 = arith.constant 0.000000e+00 : f32
    %63 = vector.broadcast %cst_35 : f32 to vector<8x128xf32>
    %c0_i32 = arith.constant 0 : i32
    %64 = vector.broadcast %c0_i32 : i32 to vector<8x128xi32>
    %65 = arith.cmpi eq, %62, %64 : vector<8x128xi32>
    %cst_36 = arith.constant 0.000000e+00 : f32
    %66 = vector.shape_cast %40 : vector<1x1xf32> to vector<1x1xf32>
    %67 = vector.broadcast %66 : vector<1x1xf32> to vector<8x128xf32>
    %68 = vector.broadcast %cst_36 : f32 to vector<8x128xf32>
    %69 = arith.select %65, %67, %68 : vector<8x128xi1>, vector<8x128xf32>
    %70 = arith.addf %63, %69 : vector<8x128xf32>
    %c1_i32 = arith.constant 1 : i32
    %71 = vector.broadcast %c1_i32 : i32 to vector<8x128xi32>
    %72 = arith.cmpi eq, %62, %71 : vector<8x128xi32>
    %cst_37 = arith.constant 0.000000e+00 : f32
    %73 = vector.shape_cast %44 : vector<1x1xf32> to vector<1x1xf32>
    %74 = vector.broadcast %73 : vector<1x1xf32> to vector<8x128xf32>
    %75 = vector.broadcast %cst_37 : f32 to vector<8x128xf32>
    %76 = arith.select %72, %74, %75 : vector<8x128xi1>, vector<8x128xf32>
    %77 = arith.addf %70, %76 : vector<8x128xf32>
    %c2_i32 = arith.constant 2 : i32
    %78 = vector.broadcast %c2_i32 : i32 to vector<8x128xi32>
    %79 = arith.cmpi eq, %62, %78 : vector<8x128xi32>
    %cst_38 = arith.constant 0.000000e+00 : f32
    %80 = vector.shape_cast %48 : vector<1x1xf32> to vector<1x1xf32>
    %81 = vector.broadcast %80 : vector<1x1xf32> to vector<8x128xf32>
    %82 = vector.broadcast %cst_38 : f32 to vector<8x128xf32>
    %83 = arith.select %79, %81, %82 : vector<8x128xi1>, vector<8x128xf32>
    %84 = arith.addf %77, %83 : vector<8x128xf32>
    %c3_i32 = arith.constant 3 : i32
    %85 = vector.broadcast %c3_i32 : i32 to vector<8x128xi32>
    %86 = arith.cmpi eq, %62, %85 : vector<8x128xi32>
    %cst_39 = arith.constant 0.000000e+00 : f32
    %87 = vector.shape_cast %51 : vector<1x1xf32> to vector<1x1xf32>
    %88 = vector.broadcast %87 : vector<1x1xf32> to vector<8x128xf32>
    %89 = vector.broadcast %cst_39 : f32 to vector<8x128xf32>
    %90 = arith.select %86, %88, %89 : vector<8x128xi1>, vector<8x128xf32>
    %91 = arith.addf %84, %90 : vector<8x128xf32>
    %c4_i32 = arith.constant 4 : i32
    %92 = vector.broadcast %c4_i32 : i32 to vector<8x128xi32>
    %93 = arith.cmpi eq, %62, %92 : vector<8x128xi32>
    %cst_40 = arith.constant 0.000000e+00 : f32
    %94 = vector.shape_cast %54 : vector<1x1xf32> to vector<1x1xf32>
    %95 = vector.broadcast %94 : vector<1x1xf32> to vector<8x128xf32>
    %96 = vector.broadcast %cst_40 : f32 to vector<8x128xf32>
    %97 = arith.select %93, %95, %96 : vector<8x128xi1>, vector<8x128xf32>
    %98 = arith.addf %91, %97 : vector<8x128xf32>
    %c5_i32 = arith.constant 5 : i32
    %99 = vector.broadcast %c5_i32 : i32 to vector<8x128xi32>
    %100 = arith.cmpi eq, %62, %99 : vector<8x128xi32>
    %cst_41 = arith.constant 0.000000e+00 : f32
    %101 = vector.shape_cast %57 : vector<1x1xf32> to vector<1x1xf32>
    %102 = vector.broadcast %101 : vector<1x1xf32> to vector<8x128xf32>
    %103 = vector.broadcast %cst_41 : f32 to vector<8x128xf32>
    %104 = arith.select %100, %102, %103 : vector<8x128xi1>, vector<8x128xf32>
    %105 = arith.addf %98, %104 : vector<8x128xf32>
    %c6_i32 = arith.constant 6 : i32
    %106 = vector.broadcast %c6_i32 : i32 to vector<8x128xi32>
    %107 = arith.cmpi eq, %62, %106 : vector<8x128xi32>
    %cst_42 = arith.constant 0.000000e+00 : f32
    %108 = vector.shape_cast %59 : vector<1x1xf32> to vector<1x1xf32>
    %109 = vector.broadcast %108 : vector<1x1xf32> to vector<8x128xf32>
    %110 = vector.broadcast %cst_42 : f32 to vector<8x128xf32>
    %111 = arith.select %107, %109, %110 : vector<8x128xi1>, vector<8x128xf32>
    %112 = arith.addf %105, %111 : vector<8x128xf32>
    %c7_i32 = arith.constant 7 : i32
    %113 = vector.broadcast %c7_i32 : i32 to vector<8x128xi32>
    %114 = arith.cmpi eq, %62, %113 : vector<8x128xi32>
    %cst_43 = arith.constant 0.000000e+00 : f32
    %115 = vector.shape_cast %61 : vector<1x1xf32> to vector<1x1xf32>
    %116 = vector.broadcast %115 : vector<1x1xf32> to vector<8x128xf32>
    %117 = vector.broadcast %cst_43 : f32 to vector<8x128xf32>
    %118 = arith.select %114, %116, %117 : vector<8x128xi1>, vector<8x128xf32>
    %119 = arith.addf %112, %118 : vector<8x128xf32>
    %120 = vector.shape_cast %119 : vector<8x128xf32> to vector<1x8x128xf32>
    %c0_44 = arith.constant 0 : index
    %c0_45 = arith.constant 0 : index
    %c0_46 = arith.constant 0 : index
    %121 = vector.load %arg9[%c0_44, %c0_45, %c0_46] : memref<1x8x128xf32, #tpu.memory_space<vmem>>, vector<1x8x128xf32>
    tpu.vector_store %arg9[%c0_44, %c0_45, %c0_46], %120 {strides = array<i32>} : memref<1x8x128xf32, #tpu.memory_space<vmem>>, vector<1x8x128xf32>,
    return
  }
  func.func @transform_0(%arg0: i32) -> (i32, i32) {
    %c0_i32 = arith.constant 0 : i32
    %c0_i32_0 = arith.constant 0 : i32
    return %arg0, %c0_i32 : i32, i32
  }
  func.func @transform_1(%arg0: i32) -> (i32, i32) {
    %c0_i32 = arith.constant 0 : i32
    %c0_i32_0 = arith.constant 0 : i32
    return %arg0, %c0_i32 : i32, i32
  }
  func.func @transform_2(%arg0: i32) -> (i32, i32) {
    %c0_i32 = arith.constant 0 : i32
    %c0_i32_0 = arith.constant 0 : i32
    %c0_i32_1 = arith.constant 0 : i32
    return %c0_i32, %c0_i32_0 : i32, i32
  }
  func.func @transform_3(%arg0: i32) -> (i32, i32) {
    %c0_i32 = arith.constant 0 : i32
    %c0_i32_0 = arith.constant 0 : i32
    %c0_i32_1 = arith.constant 0 : i32
    return %c0_i32, %c0_i32_0 : i32, i32
  }
  func.func @transform_4(%arg0: i32) -> (i32, i32) {
    %c0_i32 = arith.constant 0 : i32
    %c0_i32_0 = arith.constant 0 : i32
    return %arg0, %c0_i32 : i32, i32
  }
  func.func @transform_5(%arg0: i32) -> (i32, i32) {
    %c0_i32 = arith.constant 0 : i32
    %c0_i32_0 = arith.constant 0 : i32
    return %arg0, %c0_i32 : i32, i32
  }
  func.func @transform_6(%arg0: i32) -> (i32, i32) {
    %c0_i32 = arith.constant 0 : i32
    %c0_i32_0 = arith.constant 0 : i32
    %c0_i32_1 = arith.constant 0 : i32
    return %c0_i32, %c0_i32_0 : i32, i32
  }
  func.func @transform_7(%arg0: i32) -> (i32, i32) {
    %c0_i32 = arith.constant 0 : i32
    %c0_i32_0 = arith.constant 0 : i32
    %c0_i32_1 = arith.constant 0 : i32
    return %c0_i32, %c0_i32_0 : i32, i32
  }
  func.func @transform_8(%arg0: i32) -> (i32, i32, i32) {
    %c0_i32 = arith.constant 0 : i32
    %c0_i32_0 = arith.constant 0 : i32
    %c0_i32_1 = arith.constant 0 : i32
    return %arg0, %c0_i32, %c0_i32_0 : i32, i32, i32
  }
}

</mosaic_0001>

<llo_original>
// kernel: tpu_custom_call.1
$region0: #{tpu_custom_call.1}
  #allocation0 [shape = 'u32[]', space=smem, size = 0x4, offset = 0x4, fixed_abs, tag = 'smem constant byte address 0x4 - core index']
  #allocation1 [shape = 'u32[72,128]{1,0:T(1,128)}', space=vmem, size = 0x9000, scoped, tag = 'internal scratch']
  %s0 = inlined_call_operand.vmem [shape: f32[8,32], index: 0, kind: input, shape index: {}]
  %s1 = inlined_call_operand.vmem [shape: f32[8,1], index: 1, kind: input, shape index: {}]
  %s2 = inlined_call_operand.vmem [shape: f32[32,8], index: 2, kind: input, shape index: {}]
  %s3 = inlined_call_operand.vmem [shape: f32[1,8], index: 3, kind: input, shape index: {}]
  %s4 = inlined_call_operand.vmem [shape: f32[8,32], index: 4, kind: input, shape index: {}]
  %s5 = inlined_call_operand.vmem [shape: f32[8,1], index: 5, kind: input, shape index: {}]
  %s6 = inlined_call_operand.vmem [shape: f32[32,8], index: 6, kind: input, shape index: {}]
  %s7 = inlined_call_operand.vmem [shape: f32[1,8], index: 7, kind: input, shape index: {}]
  %s8 = inlined_call_operand.hbm [shape: f32[1,8,128], index: 8, kind: output, shape index: {}]
  %s9 = sld [smem:[#allocation0]]
  $region42: #{tpu_custom_call.1} parent=0
    _
  %s11 = ssub.s32 1, %s9
  %s12 = scalar_select 0, %s11, %s9
  $region1: #{tpu_custom_call.1} parent=0
    #allocation2 [shape = 'u8[4096]{0}', space=vmem, size = 0x1000, scoped, tag = 'output window, operand 0, single buffered']
    #allocation3 [shape = 's32[1]{0}', space=sflag, size = 0x4, scoped, tag = 'scoped memory for tpu_custom_call.1']
    %13 = vsyncpa [#allocation3], 0
    // Predicated region
    $region2: #{tpu_custom_call.1} parent=1 // pred_check
      _
    $region3: #{tpu_custom_call.1} parent=1 // pred_check_branch
      %15 = sbr.rel (0) target = $region5
    $region4: #{tpu_custom_call.1} parent=1 // pred_region
      _
    $region5: #{tpu_custom_call.1} parent=1 // pred_fallthru
      _
    // Predicated region
    $region6: #{tpu_custom_call.1} parent=1 // pred_check
      _
    $region7: #{tpu_custom_call.1} parent=1 // pred_check_branch
      %17 = sbr.rel (0) target = $region9
    $region8: #{tpu_custom_call.1} parent=1 // pred_region
      _
    $region9: #{tpu_custom_call.1} parent=1 // pred_fallthru
      _
    // Predicated region
    $region10: #{tpu_custom_call.1} parent=1 // pred_check
      _
    $region11: #{tpu_custom_call.1} parent=1 // pred_check_branch
      %19 = sbr.rel (0) target = $region13
    $region12: #{tpu_custom_call.1} parent=1 // pred_region
      _
    $region13: #{tpu_custom_call.1} parent=1 // pred_fallthru
      _
    // Predicated region
    $region14: #{tpu_custom_call.1} parent=1 // pred_check
      _
    $region15: #{tpu_custom_call.1} parent=1 // pred_check_branch
      %21 = sbr.rel (0) target = $region17
    $region16: #{tpu_custom_call.1} parent=1 // pred_region
      _
    $region17: #{tpu_custom_call.1} parent=1 // pred_fallthru
      _
    // Predicated region
    $region18: #{tpu_custom_call.1} parent=1 // pred_check
      _
    $region19: #{tpu_custom_call.1} parent=1 // pred_check_branch
      %23 = sbr.rel (0) target = $region21
    $region20: #{tpu_custom_call.1} parent=1 // pred_region
      _
    $region21: #{tpu_custom_call.1} parent=1 // pred_fallthru
      _
    // Predicated region
    $region22: #{tpu_custom_call.1} parent=1 // pred_check
      _
    $region23: #{tpu_custom_call.1} parent=1 // pred_check_branch
      %25 = sbr.rel (0) target = $region25
    $region24: #{tpu_custom_call.1} parent=1 // pred_region
      _
    $region25: #{tpu_custom_call.1} parent=1 // pred_fallthru
      _
    // Predicated region
    $region26: #{tpu_custom_call.1} parent=1 // pred_check
      _
    $region27: #{tpu_custom_call.1} parent=1 // pred_check_branch
      %27 = sbr.rel (0) target = $region29
    $region28: #{tpu_custom_call.1} parent=1 // pred_region
      _
    $region29: #{tpu_custom_call.1} parent=1 // pred_fallthru
      _
    // Predicated region
    $region30: #{tpu_custom_call.1} parent=1 // pred_check
      _
    $region31: #{tpu_custom_call.1} parent=1 // pred_check_branch
      %29 = sbr.rel (0) target = $region33
    $region32: #{tpu_custom_call.1} parent=1 // pred_region
      _
    $region33: #{tpu_custom_call.1} parent=1 // pred_fallthru
      _
    %v30 = vld [vmem:[%s0] sm:$0xff]
    %v31 = vld [vmem:[%s2] sm:$0xff]
    %v32 = vld [vmem:[%s2 + $0x8] sm:$0xff]
    %v33 = vld [vmem:[%s2 + $0x10] sm:$0xff]
    %v34 = vld [vmem:[%s2 + $0x18] sm:$0xff]
    %vm35 = vcmask 261120
    %v37 = vsel %vm35, %v30, 0
    %39 = vmatpush.msra.mxu0 0.0
    %40 = vmatpush.msra.mxu0 0.0
    %41 = vmatpush.msra.mxu0 0.0
    %42 = vmatpush.msra.mxu0 0.0
    %43 = vmatpush.msra.mxu0 0.0
    %44 = vmatpush.msra.mxu0 0.0
    %45 = vmatpush.msra.mxu0 0.0
    %46 = vmatpush.msra.mxu0 0.0
    %47 = vmatpush.msra.mxu0 0.0
    %48 = vmatpush.msra.mxu0 0.0
    %49 = vmatpush.msra.mxu0 0.0
    %50 = vmatpush.msra.mxu0 0.0
    %v51 = vand.u32 %v34, 4294901760
    %52 = vmatpush.msra.mxu0 %v51
    %v53 = vand.u32 %v33, 4294901760
    %54 = vmatpush.msra.mxu0 %v53
    %v55 = vand.u32 %v32, 4294901760
    %56 = vmatpush.msra.mxu0 %v55
    %v57 = vand.u32 %v31, 4294901760
    %58 = vmatpush.msra.mxu0 %v57
    %v59 = vand.u32 %v37, 4294901760
    %v60 = vsub.f32 %v37, %v59
    %v61 = vand.u32 %v60, 4294901760
    %v62 = vsub.f32 %v60, %v61
    %v63 = vand.u32 %v62, 4294901760
    %64 = vmatmul.f32.gmra.mxu0 %v63
    %v65 = vpop.f32.mrf.mxu0
    %v66 = vadd.f32 0.0, %v65
    %67 = vdwg.mxu0
    %68 = vmatpush.msra.mxu0 0.0
    %69 = vmatpush.msra.mxu0 0.0
    %70 = vmatpush.msra.mxu0 0.0
    %71 = vmatpush.msra.mxu0 0.0
    %72 = vmatpush.msra.mxu0 0.0
    %73 = vmatpush.msra.mxu0 0.0
    %74 = vmatpush.msra.mxu0 0.0
    %75 = vmatpush.msra.mxu0 0.0
    %76 = vmatpush.msra.mxu0 0.0
    %77 = vmatpush.msra.mxu0 0.0
    %78 = vmatpush.msra.mxu0 0.0
    %79 = vmatpush.msra.mxu0 0.0
    %v80 = vand.u32 %v34, 4294901760
    %v81 = vsub.f32 %v34, %v80
    %v82 = vand.u32 %v81, 4294901760
    %v83 = vsub.f32 %v81, %v82
    %v84 = vand.u32 %v83, 4294901760
    %85 = vmatpush.msra.mxu0 %v84
    %v86 = vand.u32 %v33, 4294901760
    %v87 = vsub.f32 %v33, %v86
    %v88 = vand.u32 %v87, 4294901760
    %v89 = vsub.f32 %v87, %v88
    %v90 = vand.u32 %v89, 4294901760
    %91 = vmatpush.msra.mxu0 %v90
    %v92 = vand.u32 %v32, 4294901760
    %v93 = vsub.f32 %v32, %v92
    %v94 = vand.u32 %v93, 4294901760
    %v95 = vsub.f32 %v93, %v94
    %v96 = vand.u32 %v95, 4294901760
    %97 = vmatpush.msra.mxu0 %v96
    %v98 = vand.u32 %v31, 4294901760
    %v99 = vsub.f32 %v31, %v98
    %v100 = vand.u32 %v99, 4294901760
    %v101 = vsub.f32 %v99, %v100
    %v102 = vand.u32 %v101, 4294901760
    %103 = vmatpush.msra.mxu0 %v102
    %v104 = vand.u32 %v37, 4294901760
    %105 = vmatmul.f32.gmra.mxu0 %v104
    %v106 = vpop.f32.mrf.mxu0
    %v107 = vadd.f32 %v66, %v106
    %108 = vdwg.mxu0
    %109 = vmatpush.msra.mxu0 0.0
    %110 = vmatpush.msra.mxu0 0.0
    %111 = vmatpush.msra.mxu0 0.0
    %112 = vmatpush.msra.mxu0 0.0
    %113 = vmatpush.msra.mxu0 0.0
    %114 = vmatpush.msra.mxu0 0.0
    %115 = vmatpush.msra.mxu0 0.0
    %116 = vmatpush.msra.mxu0 0.0
    %117 = vmatpush.msra.mxu0 0.0
    %118 = vmatpush.msra.mxu0 0.0
    %119 = vmatpush.msra.mxu0 0.0
    %120 = vmatpush.msra.mxu0 0.0
    %v121 = vand.u32 %v34, 4294901760
    %v122 = vsub.f32 %v34, %v121
    %123 = vmatpush.msra.mxu0 %v122
    %v124 = vand.u32 %v33, 4294901760
    %v125 = vsub.f32 %v33, %v124
    %126 = vmatpush.msra.mxu0 %v125
    %v127 = vand.u32 %v32, 4294901760
    %v128 = vsub.f32 %v32, %v127
    %129 = vmatpush.msra.mxu0 %v128
    %v130 = vand.u32 %v31, 4294901760
    %v131 = vsub.f32 %v31, %v130
    %132 = vmatpush.msra.mxu0 %v131
    %v133 = vand.u32 %v37, 4294901760
    %v134 = vsub.f32 %v37, %v133
    %135 = vmatmul.f32.gmra.mxu0 %v134
    %v136 = vpop.f32.mrf.mxu0
    %v137 = vadd.f32 %v107, %v136
    %138 = vdwg.mxu0
    %139 = vmatpush.msra.mxu0 0.0
    %140 = vmatpush.msra.mxu0 0.0
    %141 = vmatpush.msra.mxu0 0.0
    %142 = vmatpush.msra.mxu0 0.0
    %143 = vmatpush.msra.mxu0 0.0
    %144 = vmatpush.msra.mxu0 0.0
    %145 = vmatpush.msra.mxu0 0.0
    %146 = vmatpush.msra.mxu0 0.0
    %147 = vmatpush.msra.mxu0 0.0
    %148 = vmatpush.msra.mxu0 0.0
    %149 = vmatpush.msra.mxu0 0.0
    %150 = vmatpush.msra.mxu0 0.0
    %v151 = vand.u32 %v34, 4294901760
    %152 = vmatpush.msra.mxu0 %v151
    %v153 = vand.u32 %v33, 4294901760
    %154 = vmatpush.msra.mxu0 %v153
    %v155 = vand.u32 %v32, 4294901760
    %156 = vmatpush.msra.mxu0 %v155
    %v157 = vand.u32 %v31, 4294901760
    %158 = vmatpush.msra.mxu0 %v157
    %v159 = vand.u32 %v37, 4294901760
    %v160 = vsub.f32 %v37, %v159
    %v161 = vand.u32 %v160, 4294901760
    %162 = vmatmul.f32.gmra.mxu0 %v161
    %v163 = vpop.f32.mrf.mxu0
    %v164 = vadd.f32 %v137, %v163
    %165 = vdwg.mxu0
    %166 = vmatpush.msra.mxu0 0.0
    %167 = vmatpush.msra.mxu0 0.0
    %168 = vmatpush.msra.mxu0 0.0
    %169 = vmatpush.msra.mxu0 0.0
    %170 = vmatpush.msra.mxu0 0.0
    %171 = vmatpush.msra.mxu0 0.0
    %172 = vmatpush.msra.mxu0 0.0
    %173 = vmatpush.msra.mxu0 0.0
    %174 = vmatpush.msra.mxu0 0.0
    %175 = vmatpush.msra.mxu0 0.0
    %176 = vmatpush.msra.mxu0 0.0
    %177 = vmatpush.msra.mxu0 0.0
    %v178 = vand.u32 %v34, 4294901760
    %v179 = vsub.f32 %v34, %v178
    %v180 = vand.u32 %v179, 4294901760
    %181 = vmatpush.msra.mxu0 %v180
    %v182 = vand.u32 %v33, 4294901760
    %v183 = vsub.f32 %v33, %v182
    %v184 = vand.u32 %v183, 4294901760
    %185 = vmatpush.msra.mxu0 %v184
    %v186 = vand.u32 %v32, 4294901760
    %v187 = vsub.f32 %v32, %v186
    %v188 = vand.u32 %v187, 4294901760
    %189 = vmatpush.msra.mxu0 %v188
    %v190 = vand.u32 %v31, 4294901760
    %v191 = vsub.f32 %v31, %v190
    %v192 = vand.u32 %v191, 4294901760
    %193 = vmatpush.msra.mxu0 %v192
    %v194 = vand.u32 %v37, 4294901760
    %195 = vmatmul.f32.gmra.mxu0 %v194
    %v196 = vpop.f32.mrf.mxu0
    %v197 = vadd.f32 %v164, %v196
    %198 = vdwg.mxu0
    %199 = vmatpush.msra.mxu0 0.0
    %200 = vmatpush.msra.mxu0 0.0
    %201 = vmatpush.msra.mxu0 0.0
    %202 = vmatpush.msra.mxu0 0.0
    %203 = vmatpush.msra.mxu0 0.0
    %204 = vmatpush.msra.mxu0 0.0
    %205 = vmatpush.msra.mxu0 0.0
    %206 = vmatpush.msra.mxu0 0.0
    %207 = vmatpush.msra.mxu0 0.0
    %208 = vmatpush.msra.mxu0 0.0
    %209 = vmatpush.msra.mxu0 0.0
    %210 = vmatpush.msra.mxu0 0.0
    %v211 = vand.u32 %v34, 4294901760
    %212 = vmatpush.msra.mxu0 %v211
    %v213 = vand.u32 %v33, 4294901760
    %214 = vmatpush.msra.mxu0 %v213
    %v215 = vand.u32 %v32, 4294901760
    %216 = vmatpush.msra.mxu0 %v215
    %v217 = vand.u32 %v31, 4294901760
    %218 = vmatpush.msra.mxu0 %v217
    %v219 = vand.u32 %v37, 4294901760
    %220 = vmatmul.f32.gmra.mxu0 %v219
    %v221 = vpop.f32.mrf.mxu0
    %v222 = vadd.f32 %v197, %v221
    %223 = vdwg.mxu0
    %v224 = vld [vmem:[%s1] sm:$0xff]
    %v225 = vld [vmem:[%s3] sm:$0x1]
    %227 = vset.pattern.permute.xlu0 0
    %228 = vperm.xlu0 %227, %v224
    %v229 = vpop.permute.xlu0 %228
    %v232 = vperm.slane %v225, 0
    %v234 = vadd.f32 %v229, %v232
    %v235 = vmul.f32 %v222, 2.0
    %v236 = vsub.f32 %v234, %v235
    %v237 = vmax.f32 %v236, 0.0
    %v238 = vadd.f32 %v237, 1e-08
    %v239 = vrsqrt.pop %v238
    %v240 = vmul.f32 %v239, %v238
    %v241 = vmul.f32 %v240, %v239
    %v242 = vmul.f32 0.5, %v241
    %v243 = vsub.f32 1.5, %v242
    %v244 = vmul.f32 %v239, %v243
    %v245 = vmul.f32 %v238, %v244
    %vm246 = vcmp.eq.f32.partialorder %v238, inf
    %v247 = vsel %vm246, %v238, %v245
    %vm248 = vcmp.eq.f32.partialorder %v238, 0.0
    %v249 = vand.u32 %v238, 2147483648
    %v250 = vsel %vm248, %v249, %v247
    %v251 = vld [vmem:[%s4] sm:$0xff]
    %v252 = vld [vmem:[%s6] sm:$0xff]
    %v253 = vld [vmem:[%s6 + $0x8] sm:$0xff]
    %v254 = vld [vmem:[%s6 + $0x10] sm:$0xff]
    %v255 = vld [vmem:[%s6 + $0x18] sm:$0xff]
    %v257 = vsel %vm35, %v251, 0
    %259 = vmatpush.msra.mxu0 0.0
    %260 = vmatpush.msra.mxu0 0.0
    %261 = vmatpush.msra.mxu0 0.0
    %262 = vmatpush.msra.mxu0 0.0
    %263 = vmatpush.msra.mxu0 0.0
    %264 = vmatpush.msra.mxu0 0.0
    %265 = vmatpush.msra.mxu0 0.0
    %266 = vmatpush.msra.mxu0 0.0
    %267 = vmatpush.msra.mxu0 0.0
    %268 = vmatpush.msra.mxu0 0.0
    %269 = vmatpush.msra.mxu0 0.0
    %270 = vmatpush.msra.mxu0 0.0
    %v271 = vand.u32 %v255, 4294901760
    %272 = vmatpush.msra.mxu0 %v271
    %v273 = vand.u32 %v254, 4294901760
    %274 = vmatpush.msra.mxu0 %v273
    %v275 = vand.u32 %v253, 4294901760
    %276 = vmatpush.msra.mxu0 %v275
    %v277 = vand.u32 %v252, 4294901760
    %278 = vmatpush.msra.mxu0 %v277
    %v279 = vand.u32 %v257, 4294901760
    %v280 = vsub.f32 %v257, %v279
    %v281 = vand.u32 %v280, 4294901760
    %v282 = vsub.f32 %v280, %v281
    %v283 = vand.u32 %v282, 4294901760
    %284 = vmatmul.f32.gmra.mxu0 %v283
    %v285 = vpop.f32.mrf.mxu0
    %v286 = vadd.f32 0.0, %v285
    %287 = vdwg.mxu0
    %288 = vmatpush.msra.mxu0 0.0
    %289 = vmatpush.msra.mxu0 0.0
    %290 = vmatpush.msra.mxu0 0.0
    %291 = vmatpush.msra.mxu0 0.0
    %292 = vmatpush.msra.mxu0 0.0
    %293 = vmatpush.msra.mxu0 0.0
    %294 = vmatpush.msra.mxu0 0.0
    %295 = vmatpush.msra.mxu0 0.0
    %296 = vmatpush.msra.mxu0 0.0
    %297 = vmatpush.msra.mxu0 0.0
    %298 = vmatpush.msra.mxu0 0.0
    %299 = vmatpush.msra.mxu0 0.0
    %v300 = vand.u32 %v255, 4294901760
    %v301 = vsub.f32 %v255, %v300
    %v302 = vand.u32 %v301, 4294901760
    %v303 = vsub.f32 %v301, %v302
    %v304 = vand.u32 %v303, 4294901760
    %305 = vmatpush.msra.mxu0 %v304
    %v306 = vand.u32 %v254, 4294901760
    %v307 = vsub.f32 %v254, %v306
    %v308 = vand.u32 %v307, 4294901760
    %v309 = vsub.f32 %v307, %v308
    %v310 = vand.u32 %v309, 4294901760
    %311 = vmatpush.msra.mxu0 %v310
    %v312 = vand.u32 %v253, 4294901760
    %v313 = vsub.f32 %v253, %v312
    %v314 = vand.u32 %v313, 4294901760
    %v315 = vsub.f32 %v313, %v314
    %v316 = vand.u32 %v315, 4294901760
    %317 = vmatpush.msra.mxu0 %v316
    %v318 = vand.u32 %v252, 4294901760
    %v319 = vsub.f32 %v252, %v318
    %v320 = vand.u32 %v319, 4294901760
    %v321 = vsub.f32 %v319, %v320
    %v322 = vand.u32 %v321, 4294901760
    %323 = vmatpush.msra.mxu0 %v322
    %v324 = vand.u32 %v257, 4294901760
    %325 = vmatmul.f32.gmra.mxu0 %v324
    %v326 = vpop.f32.mrf.mxu0
    %v327 = vadd.f32 %v286, %v326
    %328 = vdwg.mxu0
    %329 = vmatpush.msra.mxu0 0.0
    %330 = vmatpush.msra.mxu0 0.0
    %331 = vmatpush.msra.mxu0 0.0
    %332 = vmatpush.msra.mxu0 0.0
    %333 = vmatpush.msra.mxu0 0.0
    %334 = vmatpush.msra.mxu0 0.0
    %335 = vmatpush.msra.mxu0 0.0
    %336 = vmatpush.msra.mxu0 0.0
    %337 = vmatpush.msra.mxu0 0.0
    %338 = vmatpush.msra.mxu0 0.0
    %339 = vmatpush.msra.mxu0 0.0
    %340 = vmatpush.msra.mxu0 0.0
    %v341 = vand.u32 %v255, 4294901760
    %v342 = vsub.f32 %v255, %v341
    %343 = vmatpush.msra.mxu0 %v342
    %v344 = vand.u32 %v254, 4294901760
    %v345 = vsub.f32 %v254, %v344
    %346 = vmatpush.msra.mxu0 %v345
    %v347 = vand.u32 %v253, 4294901760
    %v348 = vsub.f32 %v253, %v347
    %349 = vmatpush.msra.mxu0 %v348
    %v350 = vand.u32 %v252, 4294901760
    %v351 = vsub.f32 %v252, %v350
    %352 = vmatpush.msra.mxu0 %v351
    %v353 = vand.u32 %v257, 4294901760
    %v354 = vsub.f32 %v257, %v353
    %355 = vmatmul.f32.gmra.mxu0 %v354
    %v356 = vpop.f32.mrf.mxu0
    %v357 = vadd.f32 %v327, %v356
    %358 = vdwg.mxu0
    %359 = vmatpush.msra.mxu0 0.0
    %360 = vmatpush.msra.mxu0 0.0
    %361 = vmatpush.msra.mxu0 0.0
    %362 = vmatpush.msra.mxu0 0.0
    %363 = vmatpush.msra.mxu0 0.0
    %364 = vmatpush.msra.mxu0 0.0
    %365 = vmatpush.msra.mxu0 0.0
    %366 = vmatpush.msra.mxu0 0.0
    %367 = vmatpush.msra.mxu0 0.0
    %368 = vmatpush.msra.mxu0 0.0
    %369 = vmatpush.msra.mxu0 0.0
    %370 = vmatpush.msra.mxu0 0.0
    %v371 = vand.u32 %v255, 4294901760
    %372 = vmatpush.msra.mxu0 %v371
    %v373 = vand.u32 %v254, 4294901760
    %374 = vmatpush.msra.mxu0 %v373
    %v375 = vand.u32 %v253, 4294901760
    %376 = vmatpush.msra.mxu0 %v375
    %v377 = vand.u32 %v252, 4294901760
    %378 = vmatpush.msra.mxu0 %v377
    %v379 = vand.u32 %v257, 4294901760
    %v380 = vsub.f32 %v257, %v379
    %v381 = vand.u32 %v380, 4294901760
    %382 = vmatmul.f32.gmra.mxu0 %v381
    %v383 = vpop.f32.mrf.mxu0
    %v384 = vadd.f32 %v357, %v383
    %385 = vdwg.mxu0
    %386 = vmatpush.msra.mxu0 0.0
    %387 = vmatpush.msra.mxu0 0.0
    %388 = vmatpush.msra.mxu0 0.0
    %389 = vmatpush.msra.mxu0 0.0
    %390 = vmatpush.msra.mxu0 0.0
    %391 = vmatpush.msra.mxu0 0.0
    %392 = vmatpush.msra.mxu0 0.0
    %393 = vmatpush.msra.mxu0 0.0
    %394 = vmatpush.msra.mxu0 0.0
    %395 = vmatpush.msra.mxu0 0.0
    %396 = vmatpush.msra.mxu0 0.0
    %397 = vmatpush.msra.mxu0 0.0
    %v398 = vand.u32 %v255, 4294901760
    %v399 = vsub.f32 %v255, %v398
    %v400 = vand.u32 %v399, 4294901760
    %401 = vmatpush.msra.mxu0 %v400
    %v402 = vand.u32 %v254, 4294901760
    %v403 = vsub.f32 %v254, %v402
    %v404 = vand.u32 %v403, 4294901760
    %405 = vmatpush.msra.mxu0 %v404
    %v406 = vand.u32 %v253, 4294901760
    %v407 = vsub.f32 %v253, %v406
    %v408 = vand.u32 %v407, 4294901760
    %409 = vmatpush.msra.mxu0 %v408
    %v410 = vand.u32 %v252, 4294901760
    %v411 = vsub.f32 %v252, %v410
    %v412 = vand.u32 %v411, 4294901760
    %413 = vmatpush.msra.mxu0 %v412
    %v414 = vand.u32 %v257, 4294901760
    %415 = vmatmul.f32.gmra.mxu0 %v414
    %v416 = vpop.f32.mrf.mxu0
    %v417 = vadd.f32 %v384, %v416
    %418 = vdwg.mxu0
    %419 = vmatpush.msra.mxu0 0.0
    %420 = vmatpush.msra.mxu0 0.0
    %421 = vmatpush.msra.mxu0 0.0
    %422 = vmatpush.msra.mxu0 0.0
    %423 = vmatpush.msra.mxu0 0.0
    %424 = vmatpush.msra.mxu0 0.0
    %425 = vmatpush.msra.mxu0 0.0
    %426 = vmatpush.msra.mxu0 0.0
    %427 = vmatpush.msra.mxu0 0.0
    %428 = vmatpush.msra.mxu0 0.0
    %429 = vmatpush.msra.mxu0 0.0
    %430 = vmatpush.msra.mxu0 0.0
    %v431 = vand.u32 %v255, 4294901760
    %432 = vmatpush.msra.mxu0 %v431
    %v433 = vand.u32 %v254, 4294901760
    %434 = vmatpush.msra.mxu0 %v433
    %v435 = vand.u32 %v253, 4294901760
    %436 = vmatpush.msra.mxu0 %v435
    %v437 = vand.u32 %v252, 4294901760
    %438 = vmatpush.msra.mxu0 %v437
    %v439 = vand.u32 %v257, 4294901760
    %440 = vmatmul.f32.gmra.mxu0 %v439
    %v441 = vpop.f32.mrf.mxu0
    %v442 = vadd.f32 %v417, %v441
    %443 = vdwg.mxu0
    %v444 = vld [vmem:[%s5] sm:$0xff]
    %v445 = vld [vmem:[%s7] sm:$0x1]
    %447 = vset.pattern.permute.xlu0 0
    %448 = vperm.xlu0 %447, %v444
    %v449 = vpop.permute.xlu0 %448
    %v452 = vperm.slane %v445, 0
    %v454 = vadd.f32 %v449, %v452
    %v455 = vmul.f32 %v442, 2.0
    %v456 = vsub.f32 %v454, %v455
    %v457 = vmax.f32 %v456, 0.0
    %v458 = vadd.f32 %v457, 1e-08
    %v459 = vrsqrt.pop %v458
    %v460 = vmul.f32 %v459, %v458
    %v461 = vmul.f32 %v460, %v459
    %v462 = vmul.f32 0.5, %v461
    %v463 = vsub.f32 1.5, %v462
    %v464 = vmul.f32 %v459, %v463
    %v465 = vmul.f32 %v458, %v464
    %vm466 = vcmp.eq.f32.partialorder %v458, inf
    %v467 = vsel %vm466, %v458, %v465
    %vm468 = vcmp.eq.f32.partialorder %v458, 0.0
    %v469 = vand.u32 %v458, 2147483648
    %v470 = vsel %vm468, %v469, %v467
    %vm471 = vcmask 64512
    %v472 = vsel %vm471, %v250, 0.0
    %473 = vadd.xlane.f32.xlu0 %v472
    %v474 = vpop.xlane.xlu0 %473
    %v475 = vsel %vm471, %v470, 0.0
    %476 = vadd.xlane.f32.xlu0 %v475
    %v477 = vpop.xlane.xlu0 %476
    %v478 = vmul.f32 %v250, %v470
    %v479 = vsel %vm471, %v478, 0.0
    %480 = vadd.xlane.f32.xlu0 %v479
    %v481 = vpop.xlane.xlu0 %480
    %v482 = vrot.slane %v481, 4
    %v483 = vadd.f32 %v481, %v482
    %v484 = vrot.slane %v483, 2
    %v485 = vadd.f32 %v483, %v484
    %v486 = vrot.slane %v485, 1
    %v487 = vadd.f32 %v485, %v486
    %v488 = vsel %vm471, %v238, 0.0
    %489 = vadd.xlane.f32.xlu0 %v488
    %v490 = vpop.xlane.xlu0 %489
    %v491 = vrot.slane %v490, 4
    %v492 = vadd.f32 %v490, %v491
    %v493 = vrot.slane %v492, 2
    %v494 = vadd.f32 %v492, %v493
    %v495 = vrot.slane %v494, 1
    %v496 = vadd.f32 %v494, %v495
    %v497 = vsel %vm471, %v458, 0.0
    %498 = vadd.xlane.f32.xlu0 %v497
    %v499 = vpop.xlane.xlu0 %498
    %v500 = vrot.slane %v499, 4
    %v501 = vadd.f32 %v499, %v500
    %v502 = vrot.slane %v501, 2
    %v503 = vadd.f32 %v501, %v502
    %v504 = vrot.slane %v503, 1
    %v505 = vadd.f32 %v503, %v504
    %v506 = vmul.f32 %v474, %v477
    %v507 = vrot.slane %v506, 4
    %v508 = vadd.f32 %v506, %v507
    %v509 = vrot.slane %v508, 2
    %v510 = vadd.f32 %v508, %v509
    %v511 = vrot.slane %v510, 1
    %v512 = vadd.f32 %v510, %v511
    %v513 = vmul.f32 %v474, %v474
    %v514 = vrot.slane %v513, 4
    %v515 = vadd.f32 %v513, %v514
    %v516 = vrot.slane %v515, 2
    %v517 = vadd.f32 %v515, %v516
    %v518 = vrot.slane %v517, 1
    %v519 = vadd.f32 %v517, %v518
    %v520 = vmul.f32 %v477, %v477
    %v521 = vrot.slane %v520, 4
    %v522 = vadd.f32 %v520, %v521
    %v523 = vrot.slane %v522, 2
    %v524 = vadd.f32 %v522, %v523
    %v525 = vrot.slane %v524, 1
    %v526 = vadd.f32 %v524, %v525
    %v527 = vrot.slane %v474, 4
    %v528 = vadd.f32 %v474, %v527
    %v529 = vrot.slane %v528, 2
    %v530 = vadd.f32 %v528, %v529
    %v531 = vrot.slane %v530, 1
    %v532 = vadd.f32 %v530, %v531
    %v533 = vrot.slane %v477, 4
    %v534 = vadd.f32 %v477, %v533
    %v535 = vrot.slane %v534, 2
    %v536 = vadd.f32 %v534, %v535
    %v537 = vrot.slane %v536, 1
    %v538 = vadd.f32 %v536, %v537
    %v539 = vlaneseq
    %v540 = vshrl.u32 %v539, 7
    %vm541 = vcmp.eq.s32.totalorder %v540, 0
    %v542 = vsel %vm541, %v487, 0.0
    %v543 = vadd.f32 %v542, 0.0
    %vm544 = vcmp.eq.s32.totalorder %v540, 1
    %v545 = vsel %vm544, %v496, 0.0
    %v546 = vadd.f32 %v543, %v545
    %vm547 = vcmp.eq.s32.totalorder %v540, 2
    %v548 = vsel %vm547, %v505, 0.0
    %v549 = vadd.f32 %v546, %v548
    %vm550 = vcmp.eq.s32.totalorder %v540, 3
    %v551 = vsel %vm550, %v512, 0.0
    %v552 = vadd.f32 %v549, %v551
    %vm553 = vcmp.eq.s32.totalorder %v540, 4
    %v554 = vsel %vm553, %v519, 0.0
    %v555 = vadd.f32 %v552, %v554
    %vm556 = vcmp.eq.s32.totalorder %v540, 5
    %v557 = vsel %vm556, %v526, 0.0
    %v558 = vadd.f32 %v555, %v557
    %vm559 = vcmp.eq.s32.totalorder %v540, 6
    %v560 = vsel %vm559, %v532, 0.0
    %v561 = vadd.f32 %v558, %v560
    %vm562 = vcmp.eq.s32.totalorder %v540, 7
    %v563 = vsel %vm562, %v538, 0.0
    %v564 = vadd.f32 %v561, %v563
    %565 = vst [vmem:[#allocation2] sm:$0xff] %v564
    // Predicated region
    $region34: #{tpu_custom_call.1} parent=1 // pred_check
      _
    $region35: #{tpu_custom_call.1} parent=1 // pred_check_branch
      %567 = sbr.rel (0) target = $region37
    $region36: #{tpu_custom_call.1} parent=1 // pred_region
      %569 = vsyncadd [#allocation3], 0
      %s571 = sshll.u32 [#allocation2], 4
      %s572 = int_to_ptr.vmem [resolvable:$true] %s571
      %s573 = sshll.u32 %s8, 4
      %s574 = int_to_ptr.hbm [resolvable:$true] %s573
      %576 = dma.vmem_to_hbm [thread:$0]  %s572, 128, %s574, [#allocation3]
    $region37: #{tpu_custom_call.1} parent=1 // pred_fallthru
      _
    // Predicated region
    $region38: #{tpu_custom_call.1} parent=1 // pred_check
      _
    $region39: #{tpu_custom_call.1} parent=1 // pred_check_branch
      %578 = sbr.rel (0) target = $region41
    $region40: #{tpu_custom_call.1} parent=1 // pred_region
      %580 = dma.done [#allocation3], 128
    $region41: #{tpu_custom_call.1} parent=1 // pred_fallthru
      _
    %581 = vsyncpa [#allocation3], 1

// kernel: tpu_custom_call.1
$region0: #{tpu_custom_call.1}
  #allocation0 [shape = 'u32[]', space=smem, size = 0x4, offset = 0x4, fixed_abs, tag = 'smem constant byte address 0x4 - core index']
  #allocation1 [shape = 'u32[72,128]{1,0:T(1,128)}', space=vmem, size = 0x9000, scoped, tag = 'internal scratch']
  %s0 = inlined_call_operand.vmem [shape: f32[8,32], index: 0, kind: input, shape index: {}]
  %s1 = inlined_call_operand.vmem [shape: f32[8,1], index: 1, kind: input, shape index: {}]
  %s2 = inlined_call_operand.vmem [shape: f32[32,8], index: 2, kind: input, shape index: {}]
  %s3 = inlined_call_operand.vmem [shape: f32[1,8], index: 3, kind: input, shape index: {}]
  %s4 = inlined_call_operand.vmem [shape: f32[8,32], index: 4, kind: input, shape index: {}]
  %s5 = inlined_call_operand.vmem [shape: f32[8,1], index: 5, kind: input, shape index: {}]
  %s6 = inlined_call_operand.vmem [shape: f32[32,8], index: 6, kind: input, shape index: {}]
  %s7 = inlined_call_operand.vmem [shape: f32[1,8], index: 7, kind: input, shape index: {}]
  %s8 = inlined_call_operand.hbm [shape: f32[1,8,128], index: 8, kind: output, shape index: {}]
  %s9 = sld [smem:[#allocation0]]
  $region42: #{tpu_custom_call.1} parent=0
    _
  %s11 = ssub.s32 1, %s9
  %s12 = scalar_select 0, %s11, %s9
  $region1: #{tpu_custom_call.1} parent=0
    #allocation2 [shape = 'u8[4096]{0}', space=vmem, size = 0x1000, scoped, tag = 'output window, operand 0, single buffered']
    #allocation3 [shape = 's32[1]{0}', space=sflag, size = 0x4, scoped, tag = 'scoped memory for tpu_custom_call.1']
    %13 = vsyncpa [#allocation3], 0
    // Predicated region
    $region2: #{tpu_custom_call.1} parent=1 // pred_check
      _
    $region3: #{tpu_custom_call.1} parent=1 // pred_check_branch
      %15 = sbr.rel (0) target = $region5
    $region4: #{tpu_custom_call.1} parent=1 // pred_region
      _
    $region5: #{tpu_custom_call.1} parent=1 // pred_fallthru
      _
    // Predicated region
    $region6: #{tpu_custom_call.1} parent=1 // pred_check
      _
    $region7: #{tpu_custom_call.1} parent=1 // pred_check_branch
      %17 = sbr.rel (0) target = $region9
    $region8: #{tpu_custom_call.1} parent=1 // pred_region
      _
    $region9: #{tpu_custom_call.1} parent=1 // pred_fallthru
      _
    // Predicated region
    $region10: #{tpu_custom_call.1} parent=1 // pred_check
      _
    $region11: #{tpu_custom_call.1} parent=1 // pred_check_branch
      %19 = sbr.rel (0) target = $region13
    $region12: #{tpu_custom_call.1} parent=1 // pred_region
      _
    $region13: #{tpu_custom_call.1} parent=1 // pred_fallthru
      _
    // Predicated region
    $region14: #{tpu_custom_call.1} parent=1 // pred_check
      _
    $region15: #{tpu_custom_call.1} parent=1 // pred_check_branch
      %21 = sbr.rel (0) target = $region17
    $region16: #{tpu_custom_call.1} parent=1 // pred_region
      _
    $region17: #{tpu_custom_call.1} parent=1 // pred_fallthru
      _
    // Predicated region
    $region18: #{tpu_custom_call.1} parent=1 // pred_check
      _
    $region19: #{tpu_custom_call.1} parent=1 // pred_check_branch
      %23 = sbr.rel (0) target = $region21
    $region20: #{tpu_custom_call.1} parent=1 // pred_region
      _
    $region21: #{tpu_custom_call.1} parent=1 // pred_fallthru
      _
    // Predicated region
    $region22: #{tpu_custom_call.1} parent=1 // pred_check
      _
    $region23: #{tpu_custom_call.1} parent=1 // pred_check_branch
      %25 = sbr.rel (0) target = $region25
    $region24: #{tpu_custom_call.1} parent=1 // pred_region
      _
    $region25: #{tpu_custom_call.1} parent=1 // pred_fallthru
      _
    // Predicated region
    $region26: #{tpu_custom_call.1} parent=1 // pred_check
      _
    $region27: #{tpu_custom_call.1} parent=1 // pred_check_branch
      %27 = sbr.rel (0) target = $region29
    $region28: #{tpu_custom_call.1} parent=1 // pred_region
      _
    $region29: #{tpu_custom_call.1} parent=1 // pred_fallthru
      _
    // Predicated region
    $region30: #{tpu_custom_call.1} parent=1 // pred_check
      _
    $region31: #{tpu_custom_call.1} parent=1 // pred_check_branch
      %29 = sbr.rel (0) target = $region33
    $region32: #{tpu_custom_call.1} parent=1 // pred_region
      _
    $region33: #{tpu_custom_call.1} parent=1 // pred_fallthru
      _
    %v30 = vld [vmem:[%s0] sm:$0xff]
    %v31 = vld [vmem:[%s2] sm:$0xff]
    %v32 = vld [vmem:[%s2 + $0x8] sm:$0xff]
    %v33 = vld [vmem:[%s2 + $0x10] sm:$0xff]
    %v34 = vld [vmem:[%s2 + $0x18] sm:$0xff]
    %vm35 = vcmask 261120
    %v37 = vsel %vm35, %v30, 0
    %39 = vmatpush.msra.mxu0 0.0
    %40 = vmatpush.msra.mxu0 0.0
    %41 = vmatpush.msra.mxu0 0.0
    %42 = vmatpush.msra.mxu0 0.0
    %43 = vmatpush.msra.mxu0 0.0
    %44 = vmatpush.msra.mxu0 0.0
    %45 = vmatpush.msra.mxu0 0.0
    %46 = vmatpush.msra.mxu0 0.0
    %47 = vmatpush.msra.mxu0 0.0
    %48 = vmatpush.msra.mxu0 0.0
    %49 = vmatpush.msra.mxu0 0.0
    %50 = vmatpush.msra.mxu0 0.0
    %v51 = vand.u32 %v34, 4294901760
    %52 = vmatpush.msra.mxu0 %v51
    %v53 = vand.u32 %v33, 4294901760
    %54 = vmatpush.msra.mxu0 %v53
    %v55 = vand.u32 %v32, 4294901760
    %56 = vmatpush.msra.mxu0 %v55
    %v57 = vand.u32 %v31, 4294901760
    %58 = vmatpush.msra.mxu0 %v57
    %v59 = vand.u32 %v37, 4294901760
    %v60 = vsub.f32 %v37, %v59
    %v61 = vand.u32 %v60, 4294901760
    %v62 = vsub.f32 %v60, %v61
    %v63 = vand.u32 %v62, 4294901760
    %64 = vmatmul.f32.gmra.mxu0 %v63
    %v65 = vpop.f32.mrf.mxu0
    %v66 = vadd.f32 0.0, %v65
    %67 = vdwg.mxu0
    %68 = vmatpush.msra.mxu0 0.0
    %69 = vmatpush.msra.mxu0 0.0
    %70 = vmatpush.msra.mxu0 0.0
    %71 = vmatpush.msra.mxu0 0.0
    %72 = vmatpush.msra.mxu0 0.0
    %73 = vmatpush.msra.mxu0 0.0
    %74 = vmatpush.msra.mxu0 0.0
    %75 = vmatpush.msra.mxu0 0.0
    %76 = vmatpush.msra.mxu0 0.0
    %77 = vmatpush.msra.mxu0 0.0
    %78 = vmatpush.msra.mxu0 0.0
    %79 = vmatpush.msra.mxu0 0.0
    %v80 = vand.u32 %v34, 4294901760
    %v81 = vsub.f32 %v34, %v80
    %v82 = vand.u32 %v81, 4294901760
    %v83 = vsub.f32 %v81, %v82
    %v84 = vand.u32 %v83, 4294901760
    %85 = vmatpush.msra.mxu0 %v84
    %v86 = vand.u32 %v33, 4294901760
    %v87 = vsub.f32 %v33, %v86
    %v88 = vand.u32 %v87, 4294901760
    %v89 = vsub.f32 %v87, %v88
    %v90 = vand.u32 %v89, 4294901760
    %91 = vmatpush.msra.mxu0 %v90
    %v92 = vand.u32 %v32, 4294901760
    %v93 = vsub.f32 %v32, %v92
    %v94 = vand.u32 %v93, 4294901760
    %v95 = vsub.f32 %v93, %v94
    %v96 = vand.u32 %v95, 4294901760
    %97 = vmatpush.msra.mxu0 %v96
    %v98 = vand.u32 %v31, 4294901760
    %v99 = vsub.f32 %v31, %v98
    %v100 = vand.u32 %v99, 4294901760
    %v101 = vsub.f32 %v99, %v100
    %v102 = vand.u32 %v101, 4294901760
    %103 = vmatpush.msra.mxu0 %v102
    %v104 = vand.u32 %v37, 4294901760
    %105 = vmatmul.f32.gmra.mxu0 %v104
    %v106 = vpop.f32.mrf.mxu0
    %v107 = vadd.f32 %v66, %v106
    %108 = vdwg.mxu0
    %109 = vmatpush.msra.mxu0 0.0
    %110 = vmatpush.msra.mxu0 0.0
    %111 = vmatpush.msra.mxu0 0.0
    %112 = vmatpush.msra.mxu0 0.0
    %113 = vmatpush.msra.mxu0 0.0
    %114 = vmatpush.msra.mxu0 0.0
    %115 = vmatpush.msra.mxu0 0.0
    %116 = vmatpush.msra.mxu0 0.0
    %117 = vmatpush.msra.mxu0 0.0
    %118 = vmatpush.msra.mxu0 0.0
    %119 = vmatpush.msra.mxu0 0.0
    %120 = vmatpush.msra.mxu0 0.0
    %v121 = vand.u32 %v34, 4294901760
    %v122 = vsub.f32 %v34, %v121
    %123 = vmatpush.msra.mxu0 %v122
    %v124 = vand.u32 %v33, 4294901760
    %v125 = vsub.f32 %v33, %v124
    %126 = vmatpush.msra.mxu0 %v125
    %v127 = vand.u32 %v32, 4294901760
    %v128 = vsub.f32 %v32, %v127
    %129 = vmatpush.msra.mxu0 %v128
    %v130 = vand.u32 %v31, 4294901760
    %v131 = vsub.f32 %v31, %v130
    %132 = vmatpush.msra.mxu0 %v131
    %v133 = vand.u32 %v37, 4294901760
    %v134 = vsub.f32 %v37, %v133
    %135 = vmatmul.f32.gmra.mxu0 %v134
    %v136 = vpop.f32.mrf.mxu0
    %v137 = vadd.f32 %v107, %v136
    %138 = vdwg.mxu0
    %139 = vmatpush.msra.mxu0 0.0
    %140 = vmatpush.msra.mxu0 0.0
    %141 = vmatpush.msra.mxu0 0.0
    %142 = vmatpush.msra.mxu0 0.0
    %143 = vmatpush.msra.mxu0 0.0
    %144 = vmatpush.msra.mxu0 0.0
    %145 = vmatpush.msra.mxu0 0.0
    %146 = vmatpush.msra.mxu0 0.0
    %147 = vmatpush.msra.mxu0 0.0
    %148 = vmatpush.msra.mxu0 0.0
    %149 = vmatpush.msra.mxu0 0.0
    %150 = vmatpush.msra.mxu0 0.0
    %v151 = vand.u32 %v34, 4294901760
    %152 = vmatpush.msra.mxu0 %v151
    %v153 = vand.u32 %v33, 4294901760
    %154 = vmatpush.msra.mxu0 %v153
    %v155 = vand.u32 %v32, 4294901760
    %156 = vmatpush.msra.mxu0 %v155
    %v157 = vand.u32 %v31, 4294901760
    %158 = vmatpush.msra.mxu0 %v157
    %v159 = vand.u32 %v37, 4294901760
    %v160 = vsub.f32 %v37, %v159
    %v161 = vand.u32 %v160, 4294901760
    %162 = vmatmul.f32.gmra.mxu0 %v161
    %v163 = vpop.f32.mrf.mxu0
    %v164 = vadd.f32 %v137, %v163
    %165 = vdwg.mxu0
    %166 = vmatpush.msra.mxu0 0.0
    %167 = vmatpush.msra.mxu0 0.0
    %168 = vmatpush.msra.mxu0 0.0
    %169 = vmatpush.msra.mxu0 0.0
    %170 = vmatpush.msra.mxu0 0.0
    %171 = vmatpush.msra.mxu0 0.0
    %172 = vmatpush.msra.mxu0 0.0
    %173 = vmatpush.msra.mxu0 0.0
    %174 = vmatpush.msra.mxu0 0.0
    %175 = vmatpush.msra.mxu0 0.0
    %176 = vmatpush.msra.mxu0 0.0
    %177 = vmatpush.msra.mxu0 0.0
    %v178 = vand.u32 %v34, 4294901760
    %v179 = vsub.f32 %v34, %v178
    %v180 = vand.u32 %v179, 4294901760
    %181 = vmatpush.msra.mxu0 %v180
    %v182 = vand.u32 %v33, 4294901760
    %v183 = vsub.f32 %v33, %v182
    %v184 = vand.u32 %v183, 4294901760
    %185 = vmatpush.msra.mxu0 %v184
    %v186 = vand.u32 %v32, 4294901760
    %v187 = vsub.f32 %v32, %v186
    %v188 = vand.u32 %v187, 4294901760
    %189 = vmatpush.msra.mxu0 %v188
    %v190 = vand.u32 %v31, 4294901760
    %v191 = vsub.f32 %v31, %v190
    %v192 = vand.u32 %v191, 4294901760
    %193 = vmatpush.msra.mxu0 %v192
    %v194 = vand.u32 %v37, 4294901760
    %195 = vmatmul.f32.gmra.mxu0 %v194
    %v196 = vpop.f32.mrf.mxu0
    %v197 = vadd.f32 %v164, %v196
    %198 = vdwg.mxu0
    %199 = vmatpush.msra.mxu0 0.0
    %200 = vmatpush.msra.mxu0 0.0
    %201 = vmatpush.msra.mxu0 0.0
    %202 = vmatpush.msra.mxu0 0.0
    %203 = vmatpush.msra.mxu0 0.0
    %204 = vmatpush.msra.mxu0 0.0
    %205 = vmatpush.msra.mxu0 0.0
    %206 = vmatpush.msra.mxu0 0.0
    %207 = vmatpush.msra.mxu0 0.0
    %208 = vmatpush.msra.mxu0 0.0
    %209 = vmatpush.msra.mxu0 0.0
    %210 = vmatpush.msra.mxu0 0.0
    %v211 = vand.u32 %v34, 4294901760
    %212 = vmatpush.msra.mxu0 %v211
    %v213 = vand.u32 %v33, 4294901760
    %214 = vmatpush.msra.mxu0 %v213
    %v215 = vand.u32 %v32, 4294901760
    %216 = vmatpush.msra.mxu0 %v215
    %v217 = vand.u32 %v31, 4294901760
    %218 = vmatpush.msra.mxu0 %v217
    %v219 = vand.u32 %v37, 4294901760
    %220 = vmatmul.f32.gmra.mxu0 %v219
    %v221 = vpop.f32.mrf.mxu0
    %v222 = vadd.f32 %v197, %v221
    %223 = vdwg.mxu0
    %v224 = vld [vmem:[%s1] sm:$0xff]
    %v225 = vld [vmem:[%s3] sm:$0x1]
    %227 = vset.pattern.permute.xlu0 0
    %228 = vperm.xlu0 %227, %v224
    %v229 = vpop.permute.xlu0 %228
    %v232 = vperm.slane %v225, 0
    %v234 = vadd.f32 %v229, %v232
    %v235 = vmul.f32 %v222, 2.0
    %v236 = vsub.f32 %v234, %v235
    %v237 = vmax.f32 %v236, 0.0
    %v238 = vadd.f32 %v237, 1e-08
    %v239 = vrsqrt.pop %v238
    %v240 = vmul.f32 %v239, %v238
    %v241 = vmul.f32 %v240, %v239
    %v242 = vmul.f32 0.5, %v241
    %v243 = vsub.f32 1.5, %v242
    %v244 = vmul.f32 %v239, %v243
    %v245 = vmul.f32 %v238, %v244
    %vm246 = vcmp.eq.f32.partialorder %v238, inf
    %v247 = vsel %vm246, %v238, %v245
    %vm248 = vcmp.eq.f32.partialorder %v238, 0.0
    %v249 = vand.u32 %v238, 2147483648
    %v250 = vsel %vm248, %v249, %v247
    %v251 = vld [vmem:[%s4] sm:$0xff]
    %v252 = vld [vmem:[%s6] sm:$0xff]
    %v253 = vld [vmem:[%s6 + $0x8] sm:$0xff]
    %v254 = vld [vmem:[%s6 + $0x10] sm:$0xff]
    %v255 = vld [vmem:[%s6 + $0x18] sm:$0xff]
    %v257 = vsel %vm35, %v251, 0
    %259 = vmatpush.msra.mxu0 0.0
    %260 = vmatpush.msra.mxu0 0.0
    %261 = vmatpush.msra.mxu0 0.0
    %262 = vmatpush.msra.mxu0 0.0
    %263 = vmatpush.msra.mxu0 0.0
    %264 = vmatpush.msra.mxu0 0.0
    %265 = vmatpush.msra.mxu0 0.0
    %266 = vmatpush.msra.mxu0 0.0
    %267 = vmatpush.msra.mxu0 0.0
    %268 = vmatpush.msra.mxu0 0.0
    %269 = vmatpush.msra.mxu0 0.0
    %270 = vmatpush.msra.mxu0 0.0
    %v271 = vand.u32 %v255, 4294901760
    %272 = vmatpush.msra.mxu0 %v271
    %v273 = vand.u32 %v254, 4294901760
    %274 = vmatpush.msra.mxu0 %v273
    %v275 = vand.u32 %v253, 4294901760
    %276 = vmatpush.msra.mxu0 %v275
    %v277 = vand.u32 %v252, 4294901760
    %278 = vmatpush.msra.mxu0 %v277
    %v279 = vand.u32 %v257, 4294901760
    %v280 = vsub.f32 %v257, %v279
    %v281 = vand.u32 %v280, 4294901760
    %v282 = vsub.f32 %v280, %v281
    %v283 = vand.u32 %v282, 4294901760
    %284 = vmatmul.f32.gmra.mxu0 %v283
    %v285 = vpop.f32.mrf.mxu0
    %v286 = vadd.f32 0.0, %v285
    %287 = vdwg.mxu0
    %288 = vmatpush.msra.mxu0 0.0
    %289 = vmatpush.msra.mxu0 0.0
    %290 = vmatpush.msra.mxu0 0.0
    %291 = vmatpush.msra.mxu0 0.0
    %292 = vmatpush.msra.mxu0 0.0
    %293 = vmatpush.msra.mxu0 0.0
    %294 = vmatpush.msra.mxu0 0.0
    %295 = vmatpush.msra.mxu0 0.0
    %296 = vmatpush.msra.mxu0 0.0
    %297 = vmatpush.msra.mxu0 0.0
    %298 = vmatpush.msra.mxu0 0.0
    %299 = vmatpush.msra.mxu0 0.0
    %v300 = vand.u32 %v255, 4294901760
    %v301 = vsub.f32 %v255, %v300
    %v302 = vand.u32 %v301, 4294901760
    %v303 = vsub.f32 %v301, %v302
    %v304 = vand.u32 %v303, 4294901760
    %305 = vmatpush.msra.mxu0 %v304
    %v306 = vand.u32 %v254, 4294901760
    %v307 = vsub.f32 %v254, %v306
    %v308 = vand.u32 %v307, 4294901760
    %v309 = vsub.f32 %v307, %v308
    %v310 = vand.u32 %v309, 4294901760
    %311 = vmatpush.msra.mxu0 %v310
    %v312 = vand.u32 %v253, 4294901760
    %v313 = vsub.f32 %v253, %v312
    %v314 = vand.u32 %v313, 4294901760
    %v315 = vsub.f32 %v313, %v314
    %v316 = vand.u32 %v315, 4294901760
    %317 = vmatpush.msra.mxu0 %v316
    %v318 = vand.u32 %v252, 4294901760
    %v319 = vsub.f32 %v252, %v318
    %v320 = vand.u32 %v319, 4294901760
    %v321 = vsub.f32 %v319, %v320
    %v322 = vand.u32 %v321, 4294901760
    %323 = vmatpush.msra.mxu0 %v322
    %v324 = vand.u32 %v257, 4294901760
    %325 = vmatmul.f32.gmra.mxu0 %v324
    %v326 = vpop.f32.mrf.mxu0
    %v327 = vadd.f32 %v286, %v326
    %328 = vdwg.mxu0
    %329 = vmatpush.msra.mxu0 0.0
    %330 = vmatpush.msra.mxu0 0.0
    %331 = vmatpush.msra.mxu0 0.0
    %332 = vmatpush.msra.mxu0 0.0
    %333 = vmatpush.msra.mxu0 0.0
    %334 = vmatpush.msra.mxu0 0.0
    %335 = vmatpush.msra.mxu0 0.0
    %336 = vmatpush.msra.mxu0 0.0
    %337 = vmatpush.msra.mxu0 0.0
    %338 = vmatpush.msra.mxu0 0.0
    %339 = vmatpush.msra.mxu0 0.0
    %340 = vmatpush.msra.mxu0 0.0
    %v341 = vand.u32 %v255, 4294901760
    %v342 = vsub.f32 %v255, %v341
    %343 = vmatpush.msra.mxu0 %v342
    %v344 = vand.u32 %v254, 4294901760
    %v345 = vsub.f32 %v254, %v344
    %346 = vmatpush.msra.mxu0 %v345
    %v347 = vand.u32 %v253, 4294901760
    %v348 = vsub.f32 %v253, %v347
    %349 = vmatpush.msra.mxu0 %v348
    %v350 = vand.u32 %v252, 4294901760
    %v351 = vsub.f32 %v252, %v350
    %352 = vmatpush.msra.mxu0 %v351
    %v353 = vand.u32 %v257, 4294901760
    %v354 = vsub.f32 %v257, %v353
    %355 = vmatmul.f32.gmra.mxu0 %v354
    %v356 = vpop.f32.mrf.mxu0
    %v357 = vadd.f32 %v327, %v356
    %358 = vdwg.mxu0
    %359 = vmatpush.msra.mxu0 0.0
    %360 = vmatpush.msra.mxu0 0.0
    %361 = vmatpush.msra.mxu0 0.0
    %362 = vmatpush.msra.mxu0 0.0
    %363 = vmatpush.msra.mxu0 0.0
    %364 = vmatpush.msra.mxu0 0.0
    %365 = vmatpush.msra.mxu0 0.0
    %366 = vmatpush.msra.mxu0 0.0
    %367 = vmatpush.msra.mxu0 0.0
    %368 = vmatpush.msra.mxu0 0.0
    %369 = vmatpush.msra.mxu0 0.0
    %370 = vmatpush.msra.mxu0 0.0
    %v371 = vand.u32 %v255, 4294901760
    %372 = vmatpush.msra.mxu0 %v371
    %v373 = vand.u32 %v254, 4294901760
    %374 = vmatpush.msra.mxu0 %v373
    %v375 = vand.u32 %v253, 4294901760
    %376 = vmatpush.msra.mxu0 %v375
    %v377 = vand.u32 %v252, 4294901760
    %378 = vmatpush.msra.mxu0 %v377
    %v379 = vand.u32 %v257, 4294901760
    %v380 = vsub.f32 %v257, %v379
    %v381 = vand.u32 %v380, 4294901760
    %382 = vmatmul.f32.gmra.mxu0 %v381
    %v383 = vpop.f32.mrf.mxu0
    %v384 = vadd.f32 %v357, %v383
    %385 = vdwg.mxu0
    %386 = vmatpush.msra.mxu0 0.0
    %387 = vmatpush.msra.mxu0 0.0
    %388 = vmatpush.msra.mxu0 0.0
    %389 = vmatpush.msra.mxu0 0.0
    %390 = vmatpush.msra.mxu0 0.0
    %391 = vmatpush.msra.mxu0 0.0
    %392 = vmatpush.msra.mxu0 0.0
    %393 = vmatpush.msra.mxu0 0.0
    %394 = vmatpush.msra.mxu0 0.0
    %395 = vmatpush.msra.mxu0 0.0
    %396 = vmatpush.msra.mxu0 0.0
    %397 = vmatpush.msra.mxu0 0.0
    %v398 = vand.u32 %v255, 4294901760
    %v399 = vsub.f32 %v255, %v398
    %v400 = vand.u32 %v399, 4294901760
    %401 = vmatpush.msra.mxu0 %v400
    %v402 = vand.u32 %v254, 4294901760
    %v403 = vsub.f32 %v254, %v402
    %v404 = vand.u32 %v403, 4294901760
    %405 = vmatpush.msra.mxu0 %v404
    %v406 = vand.u32 %v253, 4294901760
    %v407 = vsub.f32 %v253, %v406
    %v408 = vand.u32 %v407, 4294901760
    %409 = vmatpush.msra.mxu0 %v408
    %v410 = vand.u32 %v252, 4294901760
    %v411 = vsub.f32 %v252, %v410
    %v412 = vand.u32 %v411, 4294901760
    %413 = vmatpush.msra.mxu0 %v412
    %v414 = vand.u32 %v257, 4294901760
    %415 = vmatmul.f32.gmra.mxu0 %v414
    %v416 = vpop.f32.mrf.mxu0
    %v417 = vadd.f32 %v384, %v416
    %418 = vdwg.mxu0
    %419 = vmatpush.msra.mxu0 0.0
    %420 = vmatpush.msra.mxu0 0.0
    %421 = vmatpush.msra.mxu0 0.0
    %422 = vmatpush.msra.mxu0 0.0
    %423 = vmatpush.msra.mxu0 0.0
    %424 = vmatpush.msra.mxu0 0.0
    %425 = vmatpush.msra.mxu0 0.0
    %426 = vmatpush.msra.mxu0 0.0
    %427 = vmatpush.msra.mxu0 0.0
    %428 = vmatpush.msra.mxu0 0.0
    %429 = vmatpush.msra.mxu0 0.0
    %430 = vmatpush.msra.mxu0 0.0
    %v431 = vand.u32 %v255, 4294901760
    %432 = vmatpush.msra.mxu0 %v431
    %v433 = vand.u32 %v254, 4294901760
    %434 = vmatpush.msra.mxu0 %v433
    %v435 = vand.u32 %v253, 4294901760
    %436 = vmatpush.msra.mxu0 %v435
    %v437 = vand.u32 %v252, 4294901760
    %438 = vmatpush.msra.mxu0 %v437
    %v439 = vand.u32 %v257, 4294901760
    %440 = vmatmul.f32.gmra.mxu0 %v439
    %v441 = vpop.f32.mrf.mxu0
    %v442 = vadd.f32 %v417, %v441
    %443 = vdwg.mxu0
    %v444 = vld [vmem:[%s5] sm:$0xff]
    %v445 = vld [vmem:[%s7] sm:$0x1]
    %447 = vset.pattern.permute.xlu0 0
    %448 = vperm.xlu0 %447, %v444
    %v449 = vpop.permute.xlu0 %448
    %v452 = vperm.slane %v445, 0
    %v454 = vadd.f32 %v449, %v452
    %v455 = vmul.f32 %v442, 2.0
    %v456 = vsub.f32 %v454, %v455
    %v457 = vmax.f32 %v456, 0.0
    %v458 = vadd.f32 %v457, 1e-08
    %v459 = vrsqrt.pop %v458
    %v460 = vmul.f32 %v459, %v458
    %v461 = vmul.f32 %v460, %v459
    %v462 = vmul.f32 0.5, %v461
    %v463 = vsub.f32 1.5, %v462
    %v464 = vmul.f32 %v459, %v463
    %v465 = vmul.f32 %v458, %v464
    %vm466 = vcmp.eq.f32.partialorder %v458, inf
    %v467 = vsel %vm466, %v458, %v465
    %vm468 = vcmp.eq.f32.partialorder %v458, 0.0
    %v469 = vand.u32 %v458, 2147483648
    %v470 = vsel %vm468, %v469, %v467
    %vm471 = vcmask 64512
    %v472 = vsel %vm471, %v250, 0.0
    %473 = vadd.xlane.f32.xlu0 %v472
    %v474 = vpop.xlane.xlu0 %473
    %v475 = vsel %vm471, %v470, 0.0
    %476 = vadd.xlane.f32.xlu0 %v475
    %v477 = vpop.xlane.xlu0 %476
    %v478 = vmul.f32 %v250, %v470
    %v479 = vsel %vm471, %v478, 0.0
    %480 = vadd.xlane.f32.xlu0 %v479
    %v481 = vpop.xlane.xlu0 %480
    %v482 = vrot.slane %v481, 4
    %v483 = vadd.f32 %v481, %v482
    %v484 = vrot.slane %v483, 2
    %v485 = vadd.f32 %v483, %v484
    %v486 = vrot.slane %v485, 1
    %v487 = vadd.f32 %v485, %v486
    %v488 = vsel %vm471, %v238, 0.0
    %489 = vadd.xlane.f32.xlu0 %v488
    %v490 = vpop.xlane.xlu0 %489
    %v491 = vrot.slane %v490, 4
    %v492 = vadd.f32 %v490, %v491
    %v493 = vrot.slane %v492, 2
    %v494 = vadd.f32 %v492, %v493
    %v495 = vrot.slane %v494, 1
    %v496 = vadd.f32 %v494, %v495
    %v497 = vsel %vm471, %v458, 0.0
    %498 = vadd.xlane.f32.xlu0 %v497
    %v499 = vpop.xlane.xlu0 %498
    %v500 = vrot.slane %v499, 4
    %v501 = vadd.f32 %v499, %v500
    %v502 = vrot.slane %v501, 2
    %v503 = vadd.f32 %v501, %v502
    %v504 = vrot.slane %v503, 1
    %v505 = vadd.f32 %v503, %v504
    %v506 = vmul.f32 %v474, %v477
    %v507 = vrot.slane %v506, 4
    %v508 = vadd.f32 %v506, %v507
    %v509 = vrot.slane %v508, 2
    %v510 = vadd.f32 %v508, %v509
    %v511 = vrot.slane %v510, 1
    %v512 = vadd.f32 %v510, %v511
    %v513 = vmul.f32 %v474, %v474
    %v514 = vrot.slane %v513, 4
    %v515 = vadd.f32 %v513, %v514
    %v516 = vrot.slane %v515, 2
    %v517 = vadd.f32 %v515, %v516
    %v518 = vrot.slane %v517, 1
    %v519 = vadd.f32 %v517, %v518
    %v520 = vmul.f32 %v477, %v477
    %v521 = vrot.slane %v520, 4
    %v522 = vadd.f32 %v520, %v521
    %v523 = vrot.slane %v522, 2
    %v524 = vadd.f32 %v522, %v523
    %v525 = vrot.slane %v524, 1
    %v526 = vadd.f32 %v524, %v525
    %v527 = vrot.slane %v474, 4
    %v528 = vadd.f32 %v474, %v527
    %v529 = vrot.slane %v528, 2
    %v530 = vadd.f32 %v528, %v529
    %v531 = vrot.slane %v530, 1
    %v532 = vadd.f32 %v530, %v531
    %v533 = vrot.slane %v477, 4
    %v534 = vadd.f32 %v477, %v533
    %v535 = vrot.slane %v534, 2
    %v536 = vadd.f32 %v534, %v535
    %v537 = vrot.slane %v536, 1
    %v538 = vadd.f32 %v536, %v537
    %v539 = vlaneseq
    %v540 = vshrl.u32 %v539, 7
    %vm541 = vcmp.eq.s32.totalorder %v540, 0
    %v542 = vsel %vm541, %v487, 0.0
    %v543 = vadd.f32 %v542, 0.0
    %vm544 = vcmp.eq.s32.totalorder %v540, 1
    %v545 = vsel %vm544, %v496, 0.0
    %v546 = vadd.f32 %v543, %v545
    %vm547 = vcmp.eq.s32.totalorder %v540, 2
    %v548 = vsel %vm547, %v505, 0.0
    %v549 = vadd.f32 %v546, %v548
    %vm550 = vcmp.eq.s32.totalorder %v540, 3
    %v551 = vsel %vm550, %v512, 0.0
    %v552 = vadd.f32 %v549, %v551
    %vm553 = vcmp.eq.s32.totalorder %v540, 4
    %v554 = vsel %vm553, %v519, 0.0
    %v555 = vadd.f32 %v552, %v554
    %vm556 = vcmp.eq.s32.totalorder %v540, 5
    %v557 = vsel %vm556, %v526, 0.0
    %v558 = vadd.f32 %v555, %v557
    %vm559 = vcmp.eq.s32.totalorder %v540, 6
    %v560 = vsel %vm559, %v532, 0.0
    %v561 = vadd.f32 %v558, %v560
    %vm562 = vcmp.eq.s32.totalorder %v540, 7
    %v563 = vsel %vm562, %v538, 0.0
    %v564 = vadd.f32 %v561, %v563
    %565 = vst [vmem:[#allocation2] sm:$0xff] %v564
    // Predicated region
    $region34: #{tpu_custom_call.1} parent=1 // pred_check
      _
    $region35: #{tpu_custom_call.1} parent=1 // pred_check_branch
      %567 = sbr.rel (0) target = $region37
    $region36: #{tpu_custom_call.1} parent=1 // pred_region
      %569 = vsyncadd [#allocation3], 0
      %s571 = sshll.u32 [#allocation2], 4
      %s572 = int_to_ptr.vmem [resolvable:$true] %s571
      %s573 = sshll.u32 %s8, 4
      %s574 = int_to_ptr.hbm [resolvable:$true] %s573
      %576 = dma.vmem_to_hbm [thread:$0]  %s572, 128, %s574, [#allocation3]
    $region37: #{tpu_custom_call.1} parent=1 // pred_fallthru
      _
    // Predicated region
    $region38: #{tpu_custom_call.1} parent=1 // pred_check
      _
    $region39: #{tpu_custom_call.1} parent=1 // pred_check_branch
      %578 = sbr.rel (0) target = $region41
    $region40: #{tpu_custom_call.1} parent=1 // pred_region
      %580 = dma.done [#allocation3], 128
    $region41: #{tpu_custom_call.1} parent=1 // pred_fallthru
      _
    %581 = vsyncpa [#allocation3], 1

</llo_original>
